<compile_context>
chip_gen: v5e
topology: v5e:2x2
jax: 0.10.0
libtpu: 0.0.40
codegen_flags: <defaults>
</compile_context>

<pallas_src>
import functools

import jax
import jax.numpy as jnp
from jax import lax
from jax.experimental import pallas as pl
from jax.experimental.pallas import tpu as pltpu

EPS = 1e-5
_MIB = 1024 * 1024


def _round_up(x, m):
    return (x + m - 1) // m * m


def _vmem_capacity_bytes():
    try:
        return int(pltpu.get_tpu_info().vmem_capacity_bytes)
    except Exception:
        return 64 * _MIB  # conservative fallback (v7x per-TC size)


# ----------------------------------------------------------------- fused fast path
def _fused_kernel(x_ref, w1_ref, gb_ref, w2_ref, o_ref, *, batch, b_pad):
    """Whole forward in VMEM: two matmuls + both BatchNorms + ReLU, one launch."""
    inv_n = jnp.float32(1.0 / batch)
    # h = x @ W1 (bf16 MXU operands, f32 accumulation); stays in VMEM.
    h = jnp.dot(x_ref[...], w1_ref[...], preferred_element_type=jnp.float32)
    # BN1 batch stats. Padded batch rows of x are zero -> contribute zero sums;
    # divide by the TRUE batch size (biased variance, like PyTorch training mode).
    mu1 = jnp.sum(h, axis=0, keepdims=True) * inv_n
    var1 = jnp.maximum(jnp.sum(h * h, axis=0, keepdims=True) * inv_n - mu1 * mu1, 0.0)
    scale1 = gb_ref[0:1, :] * lax.rsqrt(var1 + EPS)
    shift1 = gb_ref[1:2, :] - mu1 * scale1
    hn = jnp.maximum(h * scale1 + shift1, 0.0)
    if b_pad != batch:
        # After BN1's shift the padded rows are no longer zero: zero them so the
        # BN2 statistics need no further masking.
        row = lax.broadcasted_iota(jnp.int32, (b_pad, 1), 0)
        hn = jnp.where(row < batch, hn, 0.0)
    # y = hn @ W2
    y = jnp.dot(hn.astype(jnp.bfloat16), w2_ref[...],
                preferred_element_type=jnp.float32)
    mu2 = jnp.sum(y, axis=0, keepdims=True) * inv_n
    var2 = jnp.maximum(jnp.sum(y * y, axis=0, keepdims=True) * inv_n - mu2 * mu2, 0.0)
    o_ref[...] = ((y - mu2) * lax.rsqrt(var2 + EPS)).astype(o_ref.dtype)


# ----------------------------------------------------------------- tiled path kernels
def _stage1_stats_kernel(x_ref, w1_ref, s1_ref):
    # Stats-only pass (h is recomputed in stage 2 -> no HBM writeback of h).
    h = jnp.dot(x_ref[...], w1_ref[...], preferred_element_type=jnp.float32)
    s1_ref[0, 0:1, :] = jnp.sum(h, axis=0, keepdims=True)
    s1_ref[0, 1:2, :] = jnp.sum(h * h, axis=0, keepdims=True)


def _stage1_matmul_kernel(x_ref, w1_ref, h_ref, s1_ref):
    # h writeback variant (large in_dim). Note: stats are computed from the f32
    # matmul result but BN1 is applied to the bf16-rounded h in stage 2 (tiny,
    # within tolerance, systematic inconsistency).
    h = jnp.dot(x_ref[...], w1_ref[...], preferred_element_type=jnp.float32)
    h_ref[...] = h.astype(h_ref.dtype)
    s1_ref[0, 0:1, :] = jnp.sum(h, axis=0, keepdims=True)
    s1_ref[0, 1:2, :] = jnp.sum(h * h, axis=0, keepdims=True)


def _stage2_body(h, ab1_ref, w2_ref, y_ref, s2_ref, *, tile_rows, batch, mask_rows):
    # BN1 with pre-folded scale/shift + ReLU (f32), then y = hn @ W2.
    hn = jnp.maximum(h * ab1_ref[0:1, :] + ab1_ref[1:2, :], 0.0)
    y = jnp.dot(hn.astype(jnp.bfloat16), w2_ref[...],
                preferred_element_type=jnp.float32)
    y_ref[...] = y.astype(y_ref.dtype)
    if mask_rows:
        # Padded batch rows are non-zero after BN1's shift -> exclude from stats.
        row = pl.program_id(0) * tile_rows + lax.broadcasted_iota(
            jnp.int32, (tile_rows, 1), 0)
        y = jnp.where(row < batch, y, 0.0)
    s2_ref[0, 0:1, :] = jnp.sum(y, axis=0, keepdims=True)
    s2_ref[0, 1:2, :] = jnp.sum(y * y, axis=0, keepdims=True)


def _stage2_recompute_kernel(x_ref, w1_ref, ab1_ref, w2_ref, y_ref, s2_ref, *,
                             tile_rows, batch, mask_rows):
    h = jnp.dot(x_ref[...], w1_ref[...], preferred_element_type=jnp.float32)
    _stage2_body(h, ab1_ref, w2_ref, y_ref, s2_ref,
                 tile_rows=tile_rows, batch=batch, mask_rows=mask_rows)


def _stage2_reload_kernel(h_ref, ab1_ref, w2_ref, y_ref, s2_ref, *,
                          tile_rows, batch, mask_rows):
    _stage2_body(h_ref[...].astype(jnp.float32), ab1_ref, w2_ref, y_ref, s2_ref,
                 tile_rows=tile_rows, batch=batch, mask_rows=mask_rows)


def _stage3_kernel(y_ref, ab2_ref, o_ref):
    # BN2 (affine=False) with pre-folded scale/shift (rstd, -mu*rstd).
    y = y_ref[...].astype(jnp.float32)
    o_ref[...] = (y * ab2_ref[0:1, :] + ab2_ref[1:2, :]).astype(o_ref.dtype)


# ----------------------------------------------------------------- tiling helpers
def _pick_tile_rows(batch, row_cap, min_tiles):
    """Row tile (multiple of 16) <= row_cap: minimize batch padding (allow ~6%
    extra padded rows for a taller, MXU-friendlier tile), keep >= min_tiles grid
    steps when the batch allows it."""
    b16 = _round_up(max(batch, 1), 16)
    cap = max(16, min(row_cap, 1024, b16) // 16 * 16)
    if b16 >= 16 * min_tiles:
        cap = min(cap, max(16, (b16 // min_tiles) // 16 * 16))

    def waste(t):
        return _round_up(batch, t) - batch

    candidates = list(range(16, cap + 1, 16))
    min_waste = min(waste(t) for t in candidates)
    allow = max(min_waste, (batch * 6) // 100)
    pool = [t for t in candidates if waste(t) <= allow]
    return max(pool)


# ----------------------------------------------------------------- wrapper
def projection_mlp(x, w1, gamma, beta, w2, *, force_path="auto"):
    """DiffCSE ProjectionMLP forward (training-mode BatchNorm, batch statistics).

    x:     (B, in_dim)
    w1:    (in_dim, hidden_dim)   nn.Linear weight pre-transposed to (in, out)
    gamma: (hidden_dim,)          BN1 weight
    beta:  (hidden_dim,)          BN1 bias
    w2:    (hidden_dim, out_dim)  nn.Linear weight pre-transposed to (in, out)
    returns (B, out_dim) in x.dtype
    """
    assert force_path in ("auto", "fused", "tiled")
    batch, in_dim = x.shape
    hid_dim = w1.shape[1]
    out_dim = w2.shape[1]
    out_dtype = x.dtype
    out_isz = jnp.dtype(out_dtype).itemsize
    act_dtype = jnp.bfloat16
    f32 = jnp.float32

    # Feature dims padded to 128 lanes (lane-dense vregs / unmasked stores).
    in_p = _round_up(in_dim, 128)
    hid_p = _round_up(hid_dim, 128)
    out_p = _round_up(out_dim, 128)

    vmem_cap = _vmem_capacity_bytes()
    # Generation-aware scoped VMEM limit: ~48 MiB on v7x (64 MiB/TC), 96 MiB on v5e/v6e.
    vmem_limit = min(vmem_cap * 3 // 4, 96 * _MIB)
    # v7x proxy (64 MiB/TC, 2 TensorCores) -> want >= 2 grid steps per core.
    min_tiles = 4 if vmem_cap <= 64 * _MIB else 3

    w1_bytes = in_p * hid_p * 2
    w2_bytes = hid_p * out_p * 2
    w_bytes = w1_bytes + w2_bytes

    # Weights / BN params padded once, shared by both paths.
    w1_p = jnp.pad(w1.astype(jnp.bfloat16), ((0, in_p - in_dim), (0, hid_p - hid_dim)))
    w2_p = jnp.pad(w2.astype(jnp.bfloat16), ((0, hid_p - hid_dim), (0, out_p - out_dim)))
    gamma_p = jnp.pad(gamma.astype(f32), (0, hid_p - hid_dim))
    beta_p = jnp.pad(beta.astype(f32), (0, hid_p - hid_dim))

    # ------------------------------------------- fused single-pallas_call fast path
    b_fp = _round_up(batch, 16)
    fused_budget = min(vmem_limit // 2, 40 * _MIB)
    fused_bytes = (2 * (b_fp * in_p * 2 + b_fp * out_p * out_isz + 2 * hid_p * 4)
                   + 2 * w_bytes                       # I/O blocks (double-buffered)
                   + b_fp * (10 * hid_p + 8 * out_p))  # f32/bf16 in-kernel temporaries
    use_fused = force_path == "fused" or (force_path == "auto"
                                          and fused_bytes <= fused_budget)

    if use_fused:
        x_p = jnp.pad(x.astype(jnp.bfloat16), ((0, b_fp - batch), (0, in_p - in_dim)))
        gb = jnp.stack([gamma_p, beta_p], axis=0)                  # (2, hid_p)
        out = pl.pallas_call(
            functools.partial(_fused_kernel, batch=batch, b_pad=b_fp),
            out_shape=jax.ShapeDtypeStruct((b_fp, out_p), out_dtype),
            grid=(1,),
            in_specs=[
                pl.BlockSpec((b_fp, in_p), lambda i: (0, 0)),
                pl.BlockSpec((in_p, hid_p), lambda i: (0, 0)),
                pl.BlockSpec((2, hid_p), lambda i: (0, 0)),
                pl.BlockSpec((hid_p, out_p), lambda i: (0, 0)),
            ],
            out_specs=pl.BlockSpec((b_fp, out_p), lambda i: (0, 0)),
            compiler_params=pltpu.CompilerParams(
                dimension_semantics=("arbitrary",),
                vmem_limit_bytes=vmem_limit),
            cost_estimate=pl.CostEstimate(
                flops=2 * b_fp * hid_p * (in_p + out_p),
                transcendentals=hid_p + out_p,
                bytes_accessed=(b_fp * in_p * 2 + w_bytes + 2 * hid_p * 4
                                + b_fp * out_p * out_isz)),
        )(x_p, w1_p, gb, w2_p)
        return out[:batch, :out_dim]

    # ------------------------------------------------------------------ tiled path
    # Recompute h = x @ W1 in stage 2 instead of round-tripping h through HBM when
    # the extra flops per byte saved (in_p / 2) are below the slowest generation's
    # HBM/MXU crossover (v5e ~240 flop/byte).
    recompute_h = in_p <= 512

    tile_budget = vmem_limit * 4 // 5
    # Single-buffer large resident weights (constant index_map); keep default
    # double-buffering when they are small (footprint irrelevant).
    single_buf_w = w_bytes > 4 * _MIB
    wbuf = 1 if single_buf_w else 2

    # Per-row VMEM bytes per stage: double-buffered streamed tiles + f32 temporaries.
    row_s1 = 4 * in_p + 8 * hid_p + (0 if recompute_h else 4 * hid_p)
    if recompute_h:
        row_s2 = 4 * in_p + 10 * hid_p + 8 * out_p
        w_s1, w_s2 = wbuf * w1_bytes, wbuf * (w1_bytes + w2_bytes)
    else:
        row_s2 = 14 * hid_p + 8 * out_p
        w_s1, w_s2 = wbuf * w1_bytes, wbuf * w2_bytes
    row_cap = min(max(tile_budget - w_s1, 0) // row_s1,
                  max(tile_budget - w_s2, 0) // row_s2)
    if row_cap < 16:
        # TODO(synk): feature-axis grid for weights larger than the VMEM budget
        #             (v7x, very large hidden sizes); minimal row tiles for now.
        row_cap = 16
    tile_rows = _pick_tile_rows(batch, row_cap, min_tiles)
    b_pad = _round_up(batch, tile_rows)
    nb = b_pad // tile_rows
    mask_rows = b_pad != batch

    x_p = jnp.pad(x.astype(jnp.bfloat16), ((0, b_pad - batch), (0, in_p - in_dim)))

    cparams = pltpu.CompilerParams(dimension_semantics=("parallel",),
                                   vmem_limit_bytes=vmem_limit)

    def w_spec(shape):
        if single_buf_w:
            return pl.BlockSpec(shape, lambda i: (0, 0), pipeline_mode=pl.Buffered(1))
        return pl.BlockSpec(shape, lambda i: (0, 0))

    x_spec = pl.BlockSpec((tile_rows, in_p), lambda i: (i, 0))
    s1_spec = pl.BlockSpec((1, 2, hid_p), lambda i: (i, 0, 0))
    s2_spec = pl.BlockSpec((1, 2, out_p), lambda i: (i, 0, 0))

    # ---- stage 1: partial BN1 statistics of h = x @ W1 (h writeback only if needed)
    if recompute_h:
        s1 = pl.pallas_call(
            _stage1_stats_kernel,
            out_shape=jax.ShapeDtypeStruct((nb, 2, hid_p), f32),
            grid=(nb,),
            in_specs=[x_spec, w_spec((in_p, hid_p))],
            out_specs=s1_spec,
            compiler_params=cparams,
            cost_estimate=pl.CostEstimate(
                flops=2 * b_pad * in_p * hid_p, transcendentals=0,
                bytes_accessed=b_pad * in_p * 2 + w1_bytes + nb * 2 * hid_p * 4),
        )(x_p, w1_p)
    else:
        h, s1 = pl.pallas_call(
            _stage1_matmul_kernel,
            out_shape=(jax.ShapeDtypeStruct((b_pad, hid_p), act_dtype),
                       jax.ShapeDtypeStruct((nb, 2, hid_p), f32)),
            grid=(nb,),
            in_specs=[x_spec, w_spec((in_p, hid_p))],
            out_specs=(pl.BlockSpec((tile_rows, hid_p), lambda i: (i, 0)), s1_spec),
            compiler_params=cparams,
            cost_estimate=pl.CostEstimate(
                flops=2 * b_pad * in_p * hid_p, transcendentals=0,
                bytes_accessed=(b_pad * in_p * 2 + w1_bytes + b_pad * hid_p * 2
                                + nb * 2 * hid_p * 4)),
        )(x_p, w1_p)

    # Tiny full-batch BN1 reduce (TRUE batch size; biased variance like PyTorch).
    s1 = jnp.sum(s1, axis=0)                               # (2, hid_p)
    mu1 = s1[0] / batch
    var1 = jnp.maximum(s1[1] / batch - mu1 * mu1, 0.0)
    scale1 = gamma_p * lax.rsqrt(var1 + EPS)
    shift1 = beta_p - mu1 * scale1
    ab1 = jnp.stack([scale1, shift1], axis=0)              # (2, hid_p)

    # ---- stage 2: BN1 + ReLU, y = hn @ W2, partial BN2 statistics
    s2_kw = dict(tile_rows=tile_rows, batch=batch, mask_rows=mask_rows)
    if recompute_h:
        kernel2 = functools.partial(_stage2_recompute_kernel, **s2_kw)
        ins2 = (x_p, w1_p, ab1, w2_p)
        in_specs2 = [x_spec, w_spec((in_p, hid_p)),
                     pl.BlockSpec((2, hid_p), lambda i: (0, 0)),
                     w_spec((hid_p, out_p))]
        flops2 = 2 * b_pad * hid_p * (in_p + out_p)
    else:
        kernel2 = functools.partial(_stage2_reload_kernel, **s2_kw)
        ins2 = (h, ab1, w2_p)
        in_specs2 = [pl.BlockSpec((tile_rows, hid_p), lambda i: (i, 0)),
                     pl.BlockSpec((2, hid_p), lambda i: (0, 0)),
                     w_spec((hid_p, out_p))]
        flops2 = 2 * b_pad * hid_p * out_p
    y, s2 = pl.pallas_call(
        kernel2,
        out_shape=(jax.ShapeDtypeStruct((b_pad, out_p), act_dtype),
                   jax.ShapeDtypeStruct((nb, 2, out_p), f32)),
        grid=(nb,),
        in_specs=in_specs2,
        out_specs=(pl.BlockSpec((tile_rows, out_p), lambda i: (i, 0)), s2_spec),
        compiler_params=cparams,
        cost_estimate=pl.CostEstimate(
            flops=flops2, transcendentals=0,
            bytes_accessed=(sum(int(a.size) * a.dtype.itemsize for a in ins2)
                            + b_pad * out_p * 2 + nb * 2 * out_p * 4)),
    )(*ins2)

    # Tiny full-batch BN2 reduce.
    s2 = jnp.sum(s2, axis=0)                               # (2, out_p)
    mu2 = s2[0] / batch
    var2 = jnp.maximum(s2[1] / batch - mu2 * mu2, 0.0)
    rstd2 = lax.rsqrt(var2 + EPS)
    ab2 = jnp.stack([rstd2, -mu2 * rstd2], axis=0)         # (2, out_p)

    # ---- stage 3: BN2 normalize — weight-free, so use a much larger row tile and
    #      alias y into the output buffer when dtypes match.
    row3 = 8 * out_p + 2 * out_isz * out_p
    cap3 = max(tile_budget // row3, tile_rows)
    tile3 = tile_rows
    for k in range(nb, 0, -1):
        if nb % k == 0 and tile_rows * k <= min(cap3, 1024):
            tile3 = tile_rows * k
            break
    alias = {0: 0} if jnp.dtype(act_dtype) == jnp.dtype(out_dtype) else {}
    out = pl.pallas_call(
        _stage3_kernel,
        out_shape=jax.ShapeDtypeStruct((b_pad, out_p), out_dtype),
        grid=(b_pad // tile3,),
        in_specs=[pl.BlockSpec((tile3, out_p), lambda i: (i, 0)),
                  pl.BlockSpec((2, out_p), lambda i: (0, 0))],
        out_specs=pl.BlockSpec((tile3, out_p), lambda i: (i, 0)),
        compiler_params=cparams,
        input_output_aliases=alias,
        cost_estimate=pl.CostEstimate(
            flops=2 * b_pad * out_p, transcendentals=0,
            bytes_accessed=b_pad * out_p * (2 + out_isz) + 2 * out_p * 4),
    )(y, ab2)

    return out[:batch, :out_dim]


# ----------------------------------------------------------------- pure-JAX reference
def reference(x, w1, gamma, beta, w2):
    f32 = jnp.float32
    x = x.astype(f32)
    w1 = w1.astype(f32)
    w2 = w2.astype(f32)
    h = jnp.dot(x, w1, precision=lax.Precision.HIGHEST)
    mu = h.mean(0, keepdims=True)
    var = ((h - mu) ** 2).mean(0, keepdims=True)
    h = (h - mu) / jnp.sqrt(var + EPS) * gamma[None, :] + beta[None, :]
    h = jnp.maximum(h, 0.0)
    y = jnp.dot(h, w2, precision=lax.Precision.HIGHEST)
    mu2 = y.mean(0, keepdims=True)
    var2 = ((y - mu2) ** 2).mean(0, keepdims=True)
    return (y - mu2) / jnp.sqrt(var2 + EPS)


if __name__ == "__main__":
    # Small synthetic config. hidden_size deliberately NOT 128-aligned and batch NOT
    # a multiple of the row tile, to exercise the padding/masking paths.
    hidden_size = 96
    in_dim, hid_dim, out_dim = hidden_size, 2 * hidden_size, hidden_size
    batch = 400

    key = jax.random.PRNGKey(0)
    kx, kw1, kw2, kg, kb = jax.random.split(key, 5)

    x = jax.random.normal(kx, (batch, in_dim), jnp.float32).astype(jnp.bfloat16)

    # nn.Linear default init: U(-1/sqrt(fan_in), 1/sqrt(fan_in)); stored as (in, out).
    bound1 = 1.0 / (in_dim ** 0.5)
    w1 = jax.random.uniform(kw1, (in_dim, hid_dim), jnp.float32,
                            minval=-bound1, maxval=bound1).astype(jnp.bfloat16)
    bound2 = 1.0 / (hid_dim ** 0.5)
    w2 = jax.random.uniform(kw2, (hid_dim, out_dim), jnp.float32,
                            minval=-bound2, maxval=bound2).astype(jnp.bfloat16)

    # BatchNorm1d(affine=True) init is gamma=1, beta=0; perturb to exercise the math.
    gamma = 1.0 + 0.1 * jax.random.normal(kg, (hid_dim,), jnp.float32)
    beta = 0.1 * jax.random.normal(kb, (hid_dim,), jnp.float32)

    ref = reference(x, w1, gamma, beta, w2)

    def check(fn, name):
        out = jax.block_until_ready(fn(x, w1, gamma, beta, w2))
        assert out.shape == (batch, out_dim), f"{name}: bad shape {out.shape}"
        assert out.dtype == x.dtype, f"{name}: bad dtype {out.dtype}"
        err = float(jnp.max(jnp.abs(out.astype(jnp.float32) - ref)))
        # Tolerance accounts for bf16 MXU operands / bf16 activations vs f32 reference.
        assert jnp.allclose(out.astype(jnp.float32), ref, atol=3e-2, rtol=3e-2), (
            f"{name}: mismatch vs reference, max abs err = {err}")

    # Fused all-in-VMEM fast path (selected automatically at this size).
    check(jax.jit(projection_mlp), "fused")
    # Batch-tiled three-stage path (forced, to validate the large-problem fallback).
    check(jax.jit(functools.partial(projection_mlp, force_path="tiled")), "tiled")

    print("KERNEL_OK")
</pallas_src>

<mosaic_0001>
module attributes {stable_mosaic.version = 11 : i64} {
  func.func @_fused_kernel(%arg0: i32, %arg1: memref<400x128xbf16, #tpu.memory_space<vmem>>, %arg2: memref<128x256xbf16, #tpu.memory_space<vmem>>, %arg3: memref<2x256xf32, #tpu.memory_space<vmem>>, %arg4: memref<256x128xbf16, #tpu.memory_space<vmem>>, %arg5: memref<400x128xbf16, #tpu.memory_space<vmem>>) attributes {dimension_semantics = [#tpu.dimension_semantics<arbitrary>], iteration_bounds = array<i64: 1>, scalar_prefetch = 0 : i64, scratch_operands = 0 : i64, tpu.core_type = #tpu.core_type<tc>, window_params = [{pipeline_mode = #tpu.pipeline_mode<synchronous>, transform_indices = @transform_0, window_bounds = array<i64: 400, 128>}, {pipeline_mode = #tpu.pipeline_mode<synchronous>, transform_indices = @transform_1, window_bounds = array<i64: 128, 256>}, {pipeline_mode = #tpu.pipeline_mode<synchronous>, transform_indices = @transform_2, window_bounds = array<i64: 2, 256>}, {pipeline_mode = #tpu.pipeline_mode<synchronous>, transform_indices = @transform_3, window_bounds = array<i64: 256, 128>}, {pipeline_mode = #tpu.pipeline_mode<synchronous>, transform_indices = @transform_4, window_bounds = array<i64: 400, 128>}]} {
    %c0 = arith.constant 0 : index
    %c0_0 = arith.constant 0 : index
    %0 = vector.load %arg1[%c0, %c0_0] : memref<400x128xbf16, #tpu.memory_space<vmem>>, vector<400x128xbf16>
    %c0_1 = arith.constant 0 : index
    %c0_2 = arith.constant 0 : index
    %1 = vector.load %arg2[%c0_1, %c0_2] : memref<128x256xbf16, #tpu.memory_space<vmem>>, vector<128x256xbf16>
    %cst = arith.constant dense<0.000000e+00> : vector<400x256xf32>
    %2 = tpu.matmul %0, %1, %cst {dimension_numbers = #tpu.dot_dimension_numbers<[1], [0], [0], [1], [0, 0, 1, 1], [], []>} : vector<400x128xbf16>, vector<128x256xbf16>, vector<400x256xf32> -> vector<400x256xf32>
    %cst_3 = arith.constant dense<0.000000e+00> : vector<256xf32>
    %3 = vector.multi_reduction <add>, %2, %cst_3 [0] : vector<400x256xf32> to vector<256xf32>
    %4 = vector.shape_cast %3 : vector<256xf32> to vector<1x256xf32>
    %cst_4 = arith.constant 2.500000e-03 : f32
    %5 = vector.broadcast %cst_4 : f32 to vector<1x256xf32>
    %6 = arith.mulf %4, %5 : vector<1x256xf32>
    %7 = arith.mulf %2, %2 : vector<400x256xf32>
    %cst_5 = arith.constant dense<0.000000e+00> : vector<256xf32>
    %8 = vector.multi_reduction <add>, %7, %cst_5 [0] : vector<400x256xf32> to vector<256xf32>
    %9 = vector.shape_cast %8 : vector<256xf32> to vector<1x256xf32>
    %cst_6 = arith.constant 2.500000e-03 : f32
    %10 = vector.broadcast %cst_6 : f32 to vector<1x256xf32>
    %11 = arith.mulf %9, %10 : vector<1x256xf32>
    %12 = arith.mulf %6, %6 : vector<1x256xf32>
    %13 = arith.subf %11, %12 : vector<1x256xf32>
    %cst_7 = arith.constant 0.000000e+00 : f32
    %14 = vector.broadcast %cst_7 : f32 to vector<1x256xf32>
    %15 = arith.maximumf %13, %14 : vector<1x256xf32>
    %c0_8 = arith.constant 0 : index
    %c0_9 = arith.constant 0 : index
    %16 = vector.load %arg3[%c0_8, %c0_9] : memref<2x256xf32, #tpu.memory_space<vmem>>, vector<1x256xf32>
    %cst_10 = arith.constant 9.99999974E-6 : f32
    %17 = vector.broadcast %cst_10 : f32 to vector<1x256xf32>
    %18 = arith.addf %15, %17 : vector<1x256xf32>
    %19 = math.rsqrt %18 : vector<1x256xf32>
    %20 = arith.mulf %16, %19 : vector<1x256xf32>
    %c1 = arith.constant 1 : index
    %c0_11 = arith.constant 0 : index
    %21 = vector.load %arg3[%c1, %c0_11] : memref<2x256xf32, #tpu.memory_space<vmem>>, vector<1x256xf32>
    %22 = arith.mulf %6, %20 : vector<1x256xf32>
    %23 = arith.subf %21, %22 : vector<1x256xf32>
    %24 = vector.broadcast %20 : vector<1x256xf32> to vector<400x256xf32>
    %25 = arith.mulf %2, %24 : vector<400x256xf32>
    %26 = vector.broadcast %23 : vector<1x256xf32> to vector<400x256xf32>
    %27 = arith.addf %25, %26 : vector<400x256xf32>
    %cst_12 = arith.constant 0.000000e+00 : f32
    %28 = vector.broadcast %cst_12 : f32 to vector<400x256xf32>
    %29 = arith.maximumf %27, %28 : vector<400x256xf32>
    %30 = arith.truncf %29 : vector<400x256xf32> to vector<400x256xbf16>
    %c0_13 = arith.constant 0 : index
    %c0_14 = arith.constant 0 : index
    %31 = vector.load %arg4[%c0_13, %c0_14] : memref<256x128xbf16, #tpu.memory_space<vmem>>, vector<256x128xbf16>
    %cst_15 = arith.constant dense<0.000000e+00> : vector<400x128xf32>
    %32 = tpu.matmul %30, %31, %cst_15 {dimension_numbers = #tpu.dot_dimension_numbers<[1], [0], [0], [1], [0, 0, 1, 1], [], []>} : vector<400x256xbf16>, vector<256x128xbf16>, vector<400x128xf32> -> vector<400x128xf32>
    %cst_16 = arith.constant dense<0.000000e+00> : vector<128xf32>
    %33 = vector.multi_reduction <add>, %32, %cst_16 [0] : vector<400x128xf32> to vector<128xf32>
    %34 = vector.shape_cast %33 : vector<128xf32> to vector<1x128xf32>
    %cst_17 = arith.constant 2.500000e-03 : f32
    %35 = vector.broadcast %cst_17 : f32 to vector<1x128xf32>
    %36 = arith.mulf %34, %35 : vector<1x128xf32>
    %37 = arith.mulf %32, %32 : vector<400x128xf32>
    %cst_18 = arith.constant dense<0.000000e+00> : vector<128xf32>
    %38 = vector.multi_reduction <add>, %37, %cst_18 [0] : vector<400x128xf32> to vector<128xf32>
    %39 = vector.shape_cast %38 : vector<128xf32> to vector<1x128xf32>
    %cst_19 = arith.constant 2.500000e-03 : f32
    %40 = vector.broadcast %cst_19 : f32 to vector<1x128xf32>
    %41 = arith.mulf %39, %40 : vector<1x128xf32>
    %42 = arith.mulf %36, %36 : vector<1x128xf32>
    %43 = arith.subf %41, %42 : vector<1x128xf32>
    %cst_20 = arith.constant 0.000000e+00 : f32
    %44 = vector.broadcast %cst_20 : f32 to vector<1x128xf32>
    %45 = arith.maximumf %43, %44 : vector<1x128xf32>
    %46 = vector.broadcast %36 : vector<1x128xf32> to vector<400x128xf32>
    %47 = arith.subf %32, %46 : vector<400x128xf32>
    %cst_21 = arith.constant 9.99999974E-6 : f32
    %48 = vector.broadcast %cst_21 : f32 to vector<1x128xf32>
    %49 = arith.addf %45, %48 : vector<1x128xf32>
    %50 = math.rsqrt %49 : vector<1x128xf32>
    %51 = vector.broadcast %50 : vector<1x128xf32> to vector<400x128xf32>
    %52 = arith.mulf %47, %51 : vector<400x128xf32>
    %53 = arith.truncf %52 : vector<400x128xf32> to vector<400x128xbf16>
    %c0_22 = arith.constant 0 : index
    %c0_23 = arith.constant 0 : index
    %54 = vector.load %arg5[%c0_22, %c0_23] : memref<400x128xbf16, #tpu.memory_space<vmem>>, vector<400x128xbf16>
    tpu.vector_store %arg5[%c0_22, %c0_23], %53 {strides = array<i32>} : memref<400x128xbf16, #tpu.memory_space<vmem>>, vector<400x128xbf16>,
    return
  }
  func.func @transform_0(%arg0: i32) -> (i32, i32) {
    %c0_i32 = arith.constant 0 : i32
    %c0_i32_0 = arith.constant 0 : i32
    %c0_i32_1 = arith.constant 0 : i32
    return %c0_i32, %c0_i32_0 : i32, i32
  }
  func.func @transform_1(%arg0: i32) -> (i32, i32) {
    %c0_i32 = arith.constant 0 : i32
    %c0_i32_0 = arith.constant 0 : i32
    %c0_i32_1 = arith.constant 0 : i32
    return %c0_i32, %c0_i32_0 : i32, i32
  }
  func.func @transform_2(%arg0: i32) -> (i32, i32) {
    %c0_i32 = arith.constant 0 : i32
    %c0_i32_0 = arith.constant 0 : i32
    %c0_i32_1 = arith.constant 0 : i32
    return %c0_i32, %c0_i32_0 : i32, i32
  }
  func.func @transform_3(%arg0: i32) -> (i32, i32) {
    %c0_i32 = arith.constant 0 : i32
    %c0_i32_0 = arith.constant 0 : i32
    %c0_i32_1 = arith.constant 0 : i32
    return %c0_i32, %c0_i32_0 : i32, i32
  }
  func.func @transform_4(%arg0: i32) -> (i32, i32) {
    %c0_i32 = arith.constant 0 : i32
    %c0_i32_0 = arith.constant 0 : i32
    %c0_i32_1 = arith.constant 0 : i32
    return %c0_i32, %c0_i32_0 : i32, i32
  }
}

</mosaic_0001>

<llo_original>
// kernel: projection_mlp.1
$region0: #{projection_mlp.1}
  #allocation0 [shape = 'u32[]', space=smem, size = 0x4, offset = 0x4, fixed_abs, tag = 'smem constant byte address 0x4 - core index']
  #allocation1 [shape = 'u32[72,128]{1,0:T(1,128)}', space=vmem, size = 0x9000, scoped, tag = 'internal scratch']
  %s0 = inlined_call_operand.vmem [shape: bf16[400,128], index: 0, kind: input, shape index: {}]
  %s1 = inlined_call_operand.vmem [shape: bf16[128,256], index: 1, kind: input, shape index: {}]
  %s2 = inlined_call_operand.vmem [shape: f32[2,256], index: 2, kind: input, shape index: {}]
  %s3 = inlined_call_operand.vmem [shape: bf16[256,128], index: 3, kind: input, shape index: {}]
  %s4 = inlined_call_operand.vmem [shape: bf16[400,128], index: 4, kind: output, shape index: {}]
  %s5 = sld [smem:[#allocation0]]
  $region26: #{projection_mlp.1} parent=0
    _
  %s7 = ssub.s32 1, %s5
  %s8 = scalar_select 0, %s7, %s5
  // Predicated region
  $region2: #{projection_mlp.1} parent=0 // pred_check
    _
  $region3: #{projection_mlp.1} parent=0 // pred_check_branch
    %10 = sbr.rel (0) target = $region5
  $region4: #{projection_mlp.1} parent=0 // pred_region
    _
  $region5: #{projection_mlp.1} parent=0 // pred_fallthru
    _
  // Predicated region
  $region6: #{projection_mlp.1} parent=0 // pred_check
    _
  $region7: #{projection_mlp.1} parent=0 // pred_check_branch
    %12 = sbr.rel (0) target = $region9
  $region8: #{projection_mlp.1} parent=0 // pred_region
    _
  $region9: #{projection_mlp.1} parent=0 // pred_fallthru
    _
  // Predicated region
  $region10: #{projection_mlp.1} parent=0 // pred_check
    _
  $region11: #{projection_mlp.1} parent=0 // pred_check_branch
    %14 = sbr.rel (0) target = $region13
  $region12: #{projection_mlp.1} parent=0 // pred_region
    _
  $region13: #{projection_mlp.1} parent=0 // pred_fallthru
    _
  // Predicated region
  $region14: #{projection_mlp.1} parent=0 // pred_check
    _
  $region15: #{projection_mlp.1} parent=0 // pred_check_branch
    %16 = sbr.rel (0) target = $region17
  $region16: #{projection_mlp.1} parent=0 // pred_region
    _
  $region17: #{projection_mlp.1} parent=0 // pred_fallthru
    _
  %v17 = vld [vmem:[%s0] sm:$0xf]
  %v18 = vld [vmem:[%s0 + $0x4] sm:$0xf]
  %v19 = vld [vmem:[%s0 + $0x8] sm:$0xf]
  %v20 = vld [vmem:[%s0 + $0xc] sm:$0xf]
  %v21 = vld [vmem:[%s0 + $0x10] sm:$0xf]
  %v22 = vld [vmem:[%s0 + $0x14] sm:$0xf]
  %v23 = vld [vmem:[%s0 + $0x18] sm:$0xf]
  %v24 = vld [vmem:[%s0 + $0x1c] sm:$0xf]
  %v25 = vld [vmem:[%s0 + $0x20] sm:$0xf]
  %v26 = vld [vmem:[%s0 + $0x24] sm:$0xf]
  %v27 = vld [vmem:[%s0 + $0x28] sm:$0xf]
  %v28 = vld [vmem:[%s0 + $0x2c] sm:$0xf]
  %v29 = vld [vmem:[%s0 + $0x30] sm:$0xf]
  %v30 = vld [vmem:[%s0 + $0x34] sm:$0xf]
  %v31 = vld [vmem:[%s0 + $0x38] sm:$0xf]
  %v32 = vld [vmem:[%s0 + $0x3c] sm:$0xf]
  %v33 = vld [vmem:[%s0 + $0x40] sm:$0xf]
  %v34 = vld [vmem:[%s0 + $0x44] sm:$0xf]
  %v35 = vld [vmem:[%s0 + $0x48] sm:$0xf]
  %v36 = vld [vmem:[%s0 + $0x4c] sm:$0xf]
  %v37 = vld [vmem:[%s0 + $0x50] sm:$0xf]
  %v38 = vld [vmem:[%s0 + $0x54] sm:$0xf]
  %v39 = vld [vmem:[%s0 + $0x58] sm:$0xf]
  %v40 = vld [vmem:[%s0 + $0x5c] sm:$0xf]
  %v41 = vld [vmem:[%s0 + $0x60] sm:$0xf]
  %v42 = vld [vmem:[%s0 + $0x64] sm:$0xf]
  %v43 = vld [vmem:[%s0 + $0x68] sm:$0xf]
  %v44 = vld [vmem:[%s0 + $0x6c] sm:$0xf]
  %v45 = vld [vmem:[%s0 + $0x70] sm:$0xf]
  %v46 = vld [vmem:[%s0 + $0x74] sm:$0xf]
  %v47 = vld [vmem:[%s0 + $0x78] sm:$0xf]
  %v48 = vld [vmem:[%s0 + $0x7c] sm:$0xf]
  %v49 = vld [vmem:[%s0 + $0x80] sm:$0xf]
  %v50 = vld [vmem:[%s0 + $0x84] sm:$0xf]
  %v51 = vld [vmem:[%s0 + $0x88] sm:$0xf]
  %v52 = vld [vmem:[%s0 + $0x8c] sm:$0xf]
  %v53 = vld [vmem:[%s0 + $0x90] sm:$0xf]
  %v54 = vld [vmem:[%s0 + $0x94] sm:$0xf]
  %v55 = vld [vmem:[%s0 + $0x98] sm:$0xf]
  %v56 = vld [vmem:[%s0 + $0x9c] sm:$0xf]
  %v57 = vld [vmem:[%s0 + $0xa0] sm:$0xf]
  %v58 = vld [vmem:[%s0 + $0xa4] sm:$0xf]
  %v59 = vld [vmem:[%s0 + $0xa8] sm:$0xf]
  %v60 = vld [vmem:[%s0 + $0xac] sm:$0xf]
  %v61 = vld [vmem:[%s0 + $0xb0] sm:$0xf]
  %v62 = vld [vmem:[%s0 + $0xb4] sm:$0xf]
  %v63 = vld [vmem:[%s0 + $0xb8] sm:$0xf]
  %v64 = vld [vmem:[%s0 + $0xbc] sm:$0xf]
  %v65 = vld [vmem:[%s0 + $0xc0] sm:$0xf]
  %v66 = vld [vmem:[%s0 + $0xc4] sm:$0xf]
  %v67 = vld [vmem:[%s1] sm:$0xff]
  %v68 = vld [vmem:[%s1 + $0x8] sm:$0xff]
  %v69 = vld [vmem:[%s1 + $0x10] sm:$0xff]
  %v70 = vld [vmem:[%s1 + $0x18] sm:$0xff]
  %v71 = vld [vmem:[%s1 + $0x20] sm:$0xff]
  %v72 = vld [vmem:[%s1 + $0x28] sm:$0xff]
  %v73 = vld [vmem:[%s1 + $0x30] sm:$0xff]
  %v74 = vld [vmem:[%s1 + $0x38] sm:$0xff]
  %v75 = vld [vmem:[%s1 + $0x40] sm:$0xff]
  %v76 = vld [vmem:[%s1 + $0x48] sm:$0xff]
  %v77 = vld [vmem:[%s1 + $0x50] sm:$0xff]
  %v78 = vld [vmem:[%s1 + $0x58] sm:$0xff]
  %v79 = vld [vmem:[%s1 + $0x60] sm:$0xff]
  %v80 = vld [vmem:[%s1 + $0x68] sm:$0xff]
  %v81 = vld [vmem:[%s1 + $0x70] sm:$0xff]
  %v82 = vld [vmem:[%s1 + $0x78] sm:$0xff]
  %v133 = vunpack.c.l.b16 %v17
  %v134 = vunpack.c.l.b16 %v18
  %v135 = vunpack.c.l.b16 %v19
  %v136 = vunpack.c.l.b16 %v20
  %v137 = vunpack.c.l.b16 %v21
  %v138 = vunpack.c.l.b16 %v22
  %v139 = vunpack.c.l.b16 %v23
  %v140 = vunpack.c.l.b16 %v24
  %v141 = vunpack.c.l.b16 %v25
  %v142 = vunpack.c.l.b16 %v26
  %v143 = vunpack.c.l.b16 %v27
  %v144 = vunpack.c.l.b16 %v28
  %v145 = vunpack.c.l.b16 %v29
  %v146 = vunpack.c.l.b16 %v30
  %v147 = vunpack.c.l.b16 %v31
  %v148 = vunpack.c.l.b16 %v32
  %v149 = vunpack.c.l.b16 %v33
  %v150 = vunpack.c.l.b16 %v34
  %v151 = vunpack.c.l.b16 %v35
  %v152 = vunpack.c.l.b16 %v36
  %v153 = vunpack.c.l.b16 %v37
  %v154 = vunpack.c.l.b16 %v38
  %v155 = vunpack.c.l.b16 %v39
  %v156 = vunpack.c.l.b16 %v40
  %v157 = vunpack.c.l.b16 %v41
  %v158 = vunpack.c.l.b16 %v42
  %v159 = vunpack.c.l.b16 %v43
  %v160 = vunpack.c.l.b16 %v44
  %v161 = vunpack.c.l.b16 %v45
  %v162 = vunpack.c.l.b16 %v46
  %v163 = vunpack.c.l.b16 %v47
  %v164 = vunpack.c.l.b16 %v48
  %v165 = vunpack.c.l.b16 %v49
  %v166 = vunpack.c.l.b16 %v50
  %v167 = vunpack.c.l.b16 %v51
  %v168 = vunpack.c.l.b16 %v52
  %v169 = vunpack.c.l.b16 %v53
  %v170 = vunpack.c.l.b16 %v54
  %v171 = vunpack.c.l.b16 %v55
  %v172 = vunpack.c.l.b16 %v56
  %v173 = vunpack.c.l.b16 %v57
  %v174 = vunpack.c.l.b16 %v58
  %v175 = vunpack.c.l.b16 %v59
  %v176 = vunpack.c.l.b16 %v60
  %v177 = vunpack.c.l.b16 %v61
  %v178 = vunpack.c.l.b16 %v62
  %v179 = vunpack.c.l.b16 %v63
  %v180 = vunpack.c.l.b16 %v64
  %v181 = vunpack.c.l.b16 %v65
  %v182 = vunpack.c.l.b16 %v66
  %v183 = vpack.c.b16 %v134, %v133
  %v184 = vpack.c.b16 %v136, %v135
  %v185 = vpack.c.b16 %v138, %v137
  %v186 = vpack.c.b16 %v140, %v139
  %v187 = vpack.c.b16 %v142, %v141
  %v188 = vpack.c.b16 %v144, %v143
  %v189 = vpack.c.b16 %v146, %v145
  %v190 = vpack.c.b16 %v148, %v147
  %v191 = vpack.c.b16 %v150, %v149
  %v192 = vpack.c.b16 %v152, %v151
  %v193 = vpack.c.b16 %v154, %v153
  %v194 = vpack.c.b16 %v156, %v155
  %v195 = vpack.c.b16 %v158, %v157
  %v196 = vpack.c.b16 %v160, %v159
  %v197 = vpack.c.b16 %v162, %v161
  %v198 = vpack.c.b16 %v164, %v163
  %v199 = vpack.c.b16 %v166, %v165
  %v200 = vpack.c.b16 %v168, %v167
  %v201 = vpack.c.b16 %v170, %v169
  %v202 = vpack.c.b16 %v172, %v171
  %v203 = vpack.c.b16 %v174, %v173
  %v204 = vpack.c.b16 %v176, %v175
  %v205 = vpack.c.b16 %v178, %v177
  %v206 = vpack.c.b16 %v180, %v179
  %v207 = vpack.c.b16 %v182, %v181
  %v249 = vunpack.c.l.b16 %v67
  %v250 = vunpack.c.h.b16 %v67
  %v251 = vunpack.c.l.b16 %v68
  %v252 = vunpack.c.h.b16 %v68
  %v253 = vunpack.c.l.b16 %v69
  %v254 = vunpack.c.h.b16 %v69
  %v255 = vunpack.c.l.b16 %v70
  %v256 = vunpack.c.h.b16 %v70
  %v257 = vunpack.c.l.b16 %v71
  %v258 = vunpack.c.h.b16 %v71
  %v259 = vunpack.c.l.b16 %v72
  %v260 = vunpack.c.h.b16 %v72
  %v261 = vunpack.c.l.b16 %v73
  %v262 = vunpack.c.h.b16 %v73
  %v263 = vunpack.c.l.b16 %v74
  %v264 = vunpack.c.h.b16 %v74
  %v265 = vunpack.c.l.b16 %v75
  %v266 = vunpack.c.h.b16 %v75
  %v267 = vunpack.c.l.b16 %v76
  %v268 = vunpack.c.h.b16 %v76
  %v269 = vunpack.c.l.b16 %v77
  %v270 = vunpack.c.h.b16 %v77
  %v271 = vunpack.c.l.b16 %v78
  %v272 = vunpack.c.h.b16 %v78
  %v273 = vunpack.c.l.b16 %v79
  %v274 = vunpack.c.h.b16 %v79
  %v275 = vunpack.c.l.b16 %v80
  %v276 = vunpack.c.h.b16 %v80
  %v277 = vunpack.c.l.b16 %v81
  %v278 = vunpack.c.h.b16 %v81
  %v279 = vunpack.c.l.b16 %v82
  %v280 = vunpack.c.h.b16 %v82
  %v281 = vpack.c.b16 %v251, %v249
  %v282 = vpack.c.b16 %v252, %v250
  %v283 = vpack.c.b16 %v255, %v253
  %v284 = vpack.c.b16 %v256, %v254
  %v285 = vpack.c.b16 %v259, %v257
  %v286 = vpack.c.b16 %v260, %v258
  %v287 = vpack.c.b16 %v263, %v261
  %v288 = vpack.c.b16 %v264, %v262
  %v289 = vpack.c.b16 %v267, %v265
  %v290 = vpack.c.b16 %v268, %v266
  %v291 = vpack.c.b16 %v271, %v269
  %v292 = vpack.c.b16 %v272, %v270
  %v293 = vpack.c.b16 %v275, %v273
  %v294 = vpack.c.b16 %v276, %v274
  %v295 = vpack.c.b16 %v279, %v277
  %v296 = vpack.c.b16 %v280, %v278
  %313 = vmatpush.bf16.msra.mxu0 %v295
  %314 = vmatpush.bf16.msra.mxu0 %v293
  %315 = vmatpush.bf16.msra.mxu0 %v291
  %316 = vmatpush.bf16.msra.mxu0 %v289
  %317 = vmatpush.bf16.msra.mxu0 %v287
  %318 = vmatpush.bf16.msra.mxu0 %v285
  %319 = vmatpush.bf16.msra.mxu0 %v283
  %320 = vmatpush.bf16.msra.mxu0 %v281
  %321 = vmatmul.bf16.gmra.mxu0 %v183
  %v322 = vpop.f32.mrf.mxu0
  %v323 = vadd.f32 0.0, %v322
  %v324 = vpop.f32.mrf.mxu0
  %v325 = vadd.f32 0.0, %v324
  %326 = vmatmul.bf16.gmra.mxu0 %v184
  %v327 = vpop.f32.mrf.mxu0
  %v328 = vadd.f32 0.0, %v327
  %v329 = vpop.f32.mrf.mxu0
  %v330 = vadd.f32 0.0, %v329
  %331 = vmatmul.bf16.gmra.mxu0 %v185
  %v332 = vpop.f32.mrf.mxu0
  %v333 = vadd.f32 0.0, %v332
  %v334 = vpop.f32.mrf.mxu0
  %v335 = vadd.f32 0.0, %v334
  %336 = vmatmul.bf16.gmra.mxu0 %v186
  %v337 = vpop.f32.mrf.mxu0
  %v338 = vadd.f32 0.0, %v337
  %v339 = vpop.f32.mrf.mxu0
  %v340 = vadd.f32 0.0, %v339
  %341 = vmatmul.bf16.gmra.mxu0 %v187
  %v342 = vpop.f32.mrf.mxu0
  %v343 = vadd.f32 0.0, %v342
  %v344 = vpop.f32.mrf.mxu0
  %v345 = vadd.f32 0.0, %v344
  %346 = vmatmul.bf16.gmra.mxu0 %v188
  %v347 = vpop.f32.mrf.mxu0
  %v348 = vadd.f32 0.0, %v347
  %v349 = vpop.f32.mrf.mxu0
  %v350 = vadd.f32 0.0, %v349
  %351 = vmatmul.bf16.gmra.mxu0 %v189
  %v352 = vpop.f32.mrf.mxu0
  %v353 = vadd.f32 0.0, %v352
  %v354 = vpop.f32.mrf.mxu0
  %v355 = vadd.f32 0.0, %v354
  %356 = vmatmul.bf16.gmra.mxu0 %v190
  %v357 = vpop.f32.mrf.mxu0
  %v358 = vadd.f32 0.0, %v357
  %v359 = vpop.f32.mrf.mxu0
  %v360 = vadd.f32 0.0, %v359
  %361 = vmatmul.bf16.gmra.mxu0 %v191
  %v362 = vpop.f32.mrf.mxu0
  %v363 = vadd.f32 0.0, %v362
  %v364 = vpop.f32.mrf.mxu0
  %v365 = vadd.f32 0.0, %v364
  %366 = vmatmul.bf16.gmra.mxu0 %v192
  %v367 = vpop.f32.mrf.mxu0
  %v368 = vadd.f32 0.0, %v367
  %v369 = vpop.f32.mrf.mxu0
  %v370 = vadd.f32 0.0, %v369
  %371 = vmatmul.bf16.gmra.mxu0 %v193
  %v372 = vpop.f32.mrf.mxu0
  %v373 = vadd.f32 0.0, %v372
  %v374 = vpop.f32.mrf.mxu0
  %v375 = vadd.f32 0.0, %v374
  %376 = vmatmul.bf16.gmra.mxu0 %v194
  %v377 = vpop.f32.mrf.mxu0
  %v378 = vadd.f32 0.0, %v377
  %v379 = vpop.f32.mrf.mxu0
  %v380 = vadd.f32 0.0, %v379
  %381 = vmatmul.bf16.gmra.mxu0 %v195
  %v382 = vpop.f32.mrf.mxu0
  %v383 = vadd.f32 0.0, %v382
  %v384 = vpop.f32.mrf.mxu0
  %v385 = vadd.f32 0.0, %v384
  %386 = vmatmul.bf16.gmra.mxu0 %v196
  %v387 = vpop.f32.mrf.mxu0
  %v388 = vadd.f32 0.0, %v387
  %v389 = vpop.f32.mrf.mxu0
  %v390 = vadd.f32 0.0, %v389
  %391 = vmatmul.bf16.gmra.mxu0 %v197
  %v392 = vpop.f32.mrf.mxu0
  %v393 = vadd.f32 0.0, %v392
  %v394 = vpop.f32.mrf.mxu0
  %v395 = vadd.f32 0.0, %v394
  %396 = vmatmul.bf16.gmra.mxu0 %v198
  %v397 = vpop.f32.mrf.mxu0
  %v398 = vadd.f32 0.0, %v397
  %v399 = vpop.f32.mrf.mxu0
  %v400 = vadd.f32 0.0, %v399
  %401 = vmatmul.bf16.gmra.mxu0 %v199
  %v402 = vpop.f32.mrf.mxu0
  %v403 = vadd.f32 0.0, %v402
  %v404 = vpop.f32.mrf.mxu0
  %v405 = vadd.f32 0.0, %v404
  %406 = vmatmul.bf16.gmra.mxu0 %v200
  %v407 = vpop.f32.mrf.mxu0
  %v408 = vadd.f32 0.0, %v407
  %v409 = vpop.f32.mrf.mxu0
  %v410 = vadd.f32 0.0, %v409
  %411 = vmatmul.bf16.gmra.mxu0 %v201
  %v412 = vpop.f32.mrf.mxu0
  %v413 = vadd.f32 0.0, %v412
  %v414 = vpop.f32.mrf.mxu0
  %v415 = vadd.f32 0.0, %v414
  %416 = vmatmul.bf16.gmra.mxu0 %v202
  %v417 = vpop.f32.mrf.mxu0
  %v418 = vadd.f32 0.0, %v417
  %v419 = vpop.f32.mrf.mxu0
  %v420 = vadd.f32 0.0, %v419
  %421 = vmatmul.bf16.gmra.mxu0 %v203
  %v422 = vpop.f32.mrf.mxu0
  %v423 = vadd.f32 0.0, %v422
  %v424 = vpop.f32.mrf.mxu0
  %v425 = vadd.f32 0.0, %v424
  %426 = vmatmul.bf16.gmra.mxu0 %v204
  %v427 = vpop.f32.mrf.mxu0
  %v428 = vadd.f32 0.0, %v427
  %v429 = vpop.f32.mrf.mxu0
  %v430 = vadd.f32 0.0, %v429
  %431 = vmatmul.bf16.gmra.mxu0 %v205
  %v432 = vpop.f32.mrf.mxu0
  %v433 = vadd.f32 0.0, %v432
  %v434 = vpop.f32.mrf.mxu0
  %v435 = vadd.f32 0.0, %v434
  %436 = vmatmul.bf16.gmra.mxu0 %v206
  %v437 = vpop.f32.mrf.mxu0
  %v438 = vadd.f32 0.0, %v437
  %v439 = vpop.f32.mrf.mxu0
  %v440 = vadd.f32 0.0, %v439
  %441 = vmatmul.bf16.gmra.mxu0 %v207
  %v442 = vpop.f32.mrf.mxu0
  %v443 = vadd.f32 0.0, %v442
  %v444 = vpop.f32.mrf.mxu0
  %v445 = vadd.f32 0.0, %v444
  %446 = vdwg.mxu0
  %447 = vmatpush.bf16.msra.mxu0 %v296
  %448 = vmatpush.bf16.msra.mxu0 %v294
  %449 = vmatpush.bf16.msra.mxu0 %v292
  %450 = vmatpush.bf16.msra.mxu0 %v290
  %451 = vmatpush.bf16.msra.mxu0 %v288
  %452 = vmatpush.bf16.msra.mxu0 %v286
  %453 = vmatpush.bf16.msra.mxu0 %v284
  %454 = vmatpush.bf16.msra.mxu0 %v282
  %455 = vmatmul.bf16.gmra.mxu0 %v183
  %v456 = vpop.f32.mrf.mxu0
  %v457 = vadd.f32 0.0, %v456
  %v458 = vpop.f32.mrf.mxu0
  %v459 = vadd.f32 0.0, %v458
  %460 = vmatmul.bf16.gmra.mxu0 %v184
  %v461 = vpop.f32.mrf.mxu0
  %v462 = vadd.f32 0.0, %v461
  %v463 = vpop.f32.mrf.mxu0
  %v464 = vadd.f32 0.0, %v463
  %465 = vmatmul.bf16.gmra.mxu0 %v185
  %v466 = vpop.f32.mrf.mxu0
  %v467 = vadd.f32 0.0, %v466
  %v468 = vpop.f32.mrf.mxu0
  %v469 = vadd.f32 0.0, %v468
  %470 = vmatmul.bf16.gmra.mxu0 %v186
  %v471 = vpop.f32.mrf.mxu0
  %v472 = vadd.f32 0.0, %v471
  %v473 = vpop.f32.mrf.mxu0
  %v474 = vadd.f32 0.0, %v473
  %475 = vmatmul.bf16.gmra.mxu0 %v187
  %v476 = vpop.f32.mrf.mxu0
  %v477 = vadd.f32 0.0, %v476
  %v478 = vpop.f32.mrf.mxu0
  %v479 = vadd.f32 0.0, %v478
  %480 = vmatmul.bf16.gmra.mxu0 %v188
  %v481 = vpop.f32.mrf.mxu0
  %v482 = vadd.f32 0.0, %v481
  %v483 = vpop.f32.mrf.mxu0
  %v484 = vadd.f32 0.0, %v483
  %485 = vmatmul.bf16.gmra.mxu0 %v189
  %v486 = vpop.f32.mrf.mxu0
  %v487 = vadd.f32 0.0, %v486
  %v488 = vpop.f32.mrf.mxu0
  %v489 = vadd.f32 0.0, %v488
  %490 = vmatmul.bf16.gmra.mxu0 %v190
  %v491 = vpop.f32.mrf.mxu0
  %v492 = vadd.f32 0.0, %v491
  %v493 = vpop.f32.mrf.mxu0
  %v494 = vadd.f32 0.0, %v493
  %495 = vmatmul.bf16.gmra.mxu0 %v191
  %v496 = vpop.f32.mrf.mxu0
  %v497 = vadd.f32 0.0, %v496
  %v498 = vpop.f32.mrf.mxu0
  %v499 = vadd.f32 0.0, %v498
  %500 = vmatmul.bf16.gmra.mxu0 %v192
  %v501 = vpop.f32.mrf.mxu0
  %v502 = vadd.f32 0.0, %v501
  %v503 = vpop.f32.mrf.mxu0
  %v504 = vadd.f32 0.0, %v503
  %505 = vmatmul.bf16.gmra.mxu0 %v193
  %v506 = vpop.f32.mrf.mxu0
  %v507 = vadd.f32 0.0, %v506
  %v508 = vpop.f32.mrf.mxu0
  %v509 = vadd.f32 0.0, %v508
  %510 = vmatmul.bf16.gmra.mxu0 %v194
  %v511 = vpop.f32.mrf.mxu0
  %v512 = vadd.f32 0.0, %v511
  %v513 = vpop.f32.mrf.mxu0
  %v514 = vadd.f32 0.0, %v513
  %515 = vmatmul.bf16.gmra.mxu0 %v195
  %v516 = vpop.f32.mrf.mxu0
  %v517 = vadd.f32 0.0, %v516
  %v518 = vpop.f32.mrf.mxu0
  %v519 = vadd.f32 0.0, %v518
  %520 = vmatmul.bf16.gmra.mxu0 %v196
  %v521 = vpop.f32.mrf.mxu0
  %v522 = vadd.f32 0.0, %v521
  %v523 = vpop.f32.mrf.mxu0
  %v524 = vadd.f32 0.0, %v523
  %525 = vmatmul.bf16.gmra.mxu0 %v197
  %v526 = vpop.f32.mrf.mxu0
  %v527 = vadd.f32 0.0, %v526
  %v528 = vpop.f32.mrf.mxu0
  %v529 = vadd.f32 0.0, %v528
  %530 = vmatmul.bf16.gmra.mxu0 %v198
  %v531 = vpop.f32.mrf.mxu0
  %v532 = vadd.f32 0.0, %v531
  %v533 = vpop.f32.mrf.mxu0
  %v534 = vadd.f32 0.0, %v533
  %535 = vmatmul.bf16.gmra.mxu0 %v199
  %v536 = vpop.f32.mrf.mxu0
  %v537 = vadd.f32 0.0, %v536
  %v538 = vpop.f32.mrf.mxu0
  %v539 = vadd.f32 0.0, %v538
  %540 = vmatmul.bf16.gmra.mxu0 %v200
  %v541 = vpop.f32.mrf.mxu0
  %v542 = vadd.f32 0.0, %v541
  %v543 = vpop.f32.mrf.mxu0
  %v544 = vadd.f32 0.0, %v543
  %545 = vmatmul.bf16.gmra.mxu0 %v201
  %v546 = vpop.f32.mrf.mxu0
  %v547 = vadd.f32 0.0, %v546
  %v548 = vpop.f32.mrf.mxu0
  %v549 = vadd.f32 0.0, %v548
  %550 = vmatmul.bf16.gmra.mxu0 %v202
  %v551 = vpop.f32.mrf.mxu0
  %v552 = vadd.f32 0.0, %v551
  %v553 = vpop.f32.mrf.mxu0
  %v554 = vadd.f32 0.0, %v553
  %555 = vmatmul.bf16.gmra.mxu0 %v203
  %v556 = vpop.f32.mrf.mxu0
  %v557 = vadd.f32 0.0, %v556
  %v558 = vpop.f32.mrf.mxu0
  %v559 = vadd.f32 0.0, %v558
  %560 = vmatmul.bf16.gmra.mxu0 %v204
  %v561 = vpop.f32.mrf.mxu0
  %v562 = vadd.f32 0.0, %v561
  %v563 = vpop.f32.mrf.mxu0
  %v564 = vadd.f32 0.0, %v563
  %565 = vmatmul.bf16.gmra.mxu0 %v205
  %v566 = vpop.f32.mrf.mxu0
  %v567 = vadd.f32 0.0, %v566
  %v568 = vpop.f32.mrf.mxu0
  %v569 = vadd.f32 0.0, %v568
  %570 = vmatmul.bf16.gmra.mxu0 %v206
  %v571 = vpop.f32.mrf.mxu0
  %v572 = vadd.f32 0.0, %v571
  %v573 = vpop.f32.mrf.mxu0
  %v574 = vadd.f32 0.0, %v573
  %575 = vmatmul.bf16.gmra.mxu0 %v207
  %v576 = vpop.f32.mrf.mxu0
  %v577 = vadd.f32 0.0, %v576
  %v578 = vpop.f32.mrf.mxu0
  %v579 = vadd.f32 0.0, %v578
  %580 = vdwg.mxu0
  %v581 = vadd.f32 %v323, %v325
  %v582 = vadd.f32 %v581, %v328
  %v583 = vadd.f32 %v582, %v330
  %v584 = vadd.f32 %v583, %v333
  %v585 = vadd.f32 %v584, %v335
  %v586 = vadd.f32 %v585, %v338
  %v587 = vadd.f32 %v586, %v340
  %v588 = vadd.f32 %v587, %v343
  %v589 = vadd.f32 %v588, %v345
  %v590 = vadd.f32 %v589, %v348
  %v591 = vadd.f32 %v590, %v350
  %v592 = vadd.f32 %v591, %v353
  %v593 = vadd.f32 %v592, %v355
  %v594 = vadd.f32 %v593, %v358
  %v595 = vadd.f32 %v594, %v360
  %v596 = vadd.f32 %v595, %v363
  %v597 = vadd.f32 %v596, %v365
  %v598 = vadd.f32 %v597, %v368
  %v599 = vadd.f32 %v598, %v370
  %v600 = vadd.f32 %v599, %v373
  %v601 = vadd.f32 %v600, %v375
  %v602 = vadd.f32 %v601, %v378
  %v603 = vadd.f32 %v602, %v380
  %v604 = vadd.f32 %v603, %v383
  %v605 = vadd.f32 %v604, %v385
  %v606 = vadd.f32 %v605, %v388
  %v607 = vadd.f32 %v606, %v390
  %v608 = vadd.f32 %v607, %v393
  %v609 = vadd.f32 %v608, %v395
  %v610 = vadd.f32 %v609, %v398
  %v611 = vadd.f32 %v610, %v400
  %v612 = vadd.f32 %v611, %v403
  %v613 = vadd.f32 %v612, %v405
  %v614 = vadd.f32 %v613, %v408
  %v615 = vadd.f32 %v614, %v410
  %v616 = vadd.f32 %v615, %v413
  %v617 = vadd.f32 %v616, %v415
  %v618 = vadd.f32 %v617, %v418
  %v619 = vadd.f32 %v618, %v420
  %v620 = vadd.f32 %v619, %v423
  %v621 = vadd.f32 %v620, %v425
  %v622 = vadd.f32 %v621, %v428
  %v623 = vadd.f32 %v622, %v430
  %v624 = vadd.f32 %v623, %v433
  %v625 = vadd.f32 %v624, %v435
  %v626 = vadd.f32 %v625, %v438
  %v627 = vadd.f32 %v626, %v440
  %v628 = vadd.f32 %v627, %v443
  %v629 = vadd.f32 %v628, %v445
  %v630 = vrot.slane %v629, 4
  %v631 = vadd.f32 %v629, %v630
  %v632 = vrot.slane %v631, 2
  %v633 = vadd.f32 %v631, %v632
  %v634 = vrot.slane %v633, 1
  %v635 = vadd.f32 %v633, %v634
  %v636 = vadd.f32 %v457, %v459
  %v637 = vadd.f32 %v636, %v462
  %v638 = vadd.f32 %v637, %v464
  %v639 = vadd.f32 %v638, %v467
  %v640 = vadd.f32 %v639, %v469
  %v641 = vadd.f32 %v640, %v472
  %v642 = vadd.f32 %v641, %v474
  %v643 = vadd.f32 %v642, %v477
  %v644 = vadd.f32 %v643, %v479
  %v645 = vadd.f32 %v644, %v482
  %v646 = vadd.f32 %v645, %v484
  %v647 = vadd.f32 %v646, %v487
  %v648 = vadd.f32 %v647, %v489
  %v649 = vadd.f32 %v648, %v492
  %v650 = vadd.f32 %v649, %v494
  %v651 = vadd.f32 %v650, %v497
  %v652 = vadd.f32 %v651, %v499
  %v653 = vadd.f32 %v652, %v502
  %v654 = vadd.f32 %v653, %v504
  %v655 = vadd.f32 %v654, %v507
  %v656 = vadd.f32 %v655, %v509
  %v657 = vadd.f32 %v656, %v512
  %v658 = vadd.f32 %v657, %v514
  %v659 = vadd.f32 %v658, %v517
  %v660 = vadd.f32 %v659, %v519
  %v661 = vadd.f32 %v660, %v522
  %v662 = vadd.f32 %v661, %v524
  %v663 = vadd.f32 %v662, %v527
  %v664 = vadd.f32 %v663, %v529
  %v665 = vadd.f32 %v664, %v532
  %v666 = vadd.f32 %v665, %v534
  %v667 = vadd.f32 %v666, %v537
  %v668 = vadd.f32 %v667, %v539
  %v669 = vadd.f32 %v668, %v542
  %v670 = vadd.f32 %v669, %v544
  %v671 = vadd.f32 %v670, %v547
  %v672 = vadd.f32 %v671, %v549
  %v673 = vadd.f32 %v672, %v552
  %v674 = vadd.f32 %v673, %v554
  %v675 = vadd.f32 %v674, %v557
  %v676 = vadd.f32 %v675, %v559
  %v677 = vadd.f32 %v676, %v562
  %v678 = vadd.f32 %v677, %v564
  %v679 = vadd.f32 %v678, %v567
  %v680 = vadd.f32 %v679, %v569
  %v681 = vadd.f32 %v680, %v572
  %v682 = vadd.f32 %v681, %v574
  %v683 = vadd.f32 %v682, %v577
  %v684 = vadd.f32 %v683, %v579
  %v685 = vrot.slane %v684, 4
  %v686 = vadd.f32 %v684, %v685
  %v687 = vrot.slane %v686, 2
  %v688 = vadd.f32 %v686, %v687
  %v689 = vrot.slane %v688, 1
  %v690 = vadd.f32 %v688, %v689
  %v691 = vmul.f32 %v635, 0.0025
  %v692 = vmul.f32 %v690, 0.0025
  %v693 = vmul.f32 %v323, %v323
  %v694 = vmul.f32 %v457, %v457
  %v695 = vmul.f32 %v325, %v325
  %v696 = vmul.f32 %v459, %v459
  %v697 = vmul.f32 %v328, %v328
  %v698 = vmul.f32 %v462, %v462
  %v699 = vmul.f32 %v330, %v330
  %v700 = vmul.f32 %v464, %v464
  %v701 = vmul.f32 %v333, %v333
  %v702 = vmul.f32 %v467, %v467
  %v703 = vmul.f32 %v335, %v335
  %v704 = vmul.f32 %v469, %v469
  %v705 = vmul.f32 %v338, %v338
  %v706 = vmul.f32 %v472, %v472
  %v707 = vmul.f32 %v340, %v340
  %v708 = vmul.f32 %v474, %v474
  %v709 = vmul.f32 %v343, %v343
  %v710 = vmul.f32 %v477, %v477
  %v711 = vmul.f32 %v345, %v345
  %v712 = vmul.f32 %v479, %v479
  %v713 = vmul.f32 %v348, %v348
  %v714 = vmul.f32 %v482, %v482
  %v715 = vmul.f32 %v350, %v350
  %v716 = vmul.f32 %v484, %v484
  %v717 = vmul.f32 %v353, %v353
  %v718 = vmul.f32 %v487, %v487
  %v719 = vmul.f32 %v355, %v355
  %v720 = vmul.f32 %v489, %v489
  %v721 = vmul.f32 %v358, %v358
  %v722 = vmul.f32 %v492, %v492
  %v723 = vmul.f32 %v360, %v360
  %v724 = vmul.f32 %v494, %v494
  %v725 = vmul.f32 %v363, %v363
  %v726 = vmul.f32 %v497, %v497
  %v727 = vmul.f32 %v365, %v365
  %v728 = vmul.f32 %v499, %v499
  %v729 = vmul.f32 %v368, %v368
  %v730 = vmul.f32 %v502, %v502
  %v731 = vmul.f32 %v370, %v370
  %v732 = vmul.f32 %v504, %v504
  %v733 = vmul.f32 %v373, %v373
  %v734 = vmul.f32 %v507, %v507
  %v735 = vmul.f32 %v375, %v375
  %v736 = vmul.f32 %v509, %v509
  %v737 = vmul.f32 %v378, %v378
  %v738 = vmul.f32 %v512, %v512
  %v739 = vmul.f32 %v380, %v380
  %v740 = vmul.f32 %v514, %v514
  %v741 = vmul.f32 %v383, %v383
  %v742 = vmul.f32 %v517, %v517
  %v743 = vmul.f32 %v385, %v385
  %v744 = vmul.f32 %v519, %v519
  %v745 = vmul.f32 %v388, %v388
  %v746 = vmul.f32 %v522, %v522
  %v747 = vmul.f32 %v390, %v390
  %v748 = vmul.f32 %v524, %v524
  %v749 = vmul.f32 %v393, %v393
  %v750 = vmul.f32 %v527, %v527
  %v751 = vmul.f32 %v395, %v395
  %v752 = vmul.f32 %v529, %v529
  %v753 = vmul.f32 %v398, %v398
  %v754 = vmul.f32 %v532, %v532
  %v755 = vmul.f32 %v400, %v400
  %v756 = vmul.f32 %v534, %v534
  %v757 = vmul.f32 %v403, %v403
  %v758 = vmul.f32 %v537, %v537
  %v759 = vmul.f32 %v405, %v405
  %v760 = vmul.f32 %v539, %v539
  %v761 = vmul.f32 %v408, %v408
  %v762 = vmul.f32 %v542, %v542
  %v763 = vmul.f32 %v410, %v410
  %v764 = vmul.f32 %v544, %v544
  %v765 = vmul.f32 %v413, %v413
  %v766 = vmul.f32 %v547, %v547
  %v767 = vmul.f32 %v415, %v415
  %v768 = vmul.f32 %v549, %v549
  %v769 = vmul.f32 %v418, %v418
  %v770 = vmul.f32 %v552, %v552
  %v771 = vmul.f32 %v420, %v420
  %v772 = vmul.f32 %v554, %v554
  %v773 = vmul.f32 %v423, %v423
  %v774 = vmul.f32 %v557, %v557
  %v775 = vmul.f32 %v425, %v425
  %v776 = vmul.f32 %v559, %v559
  %v777 = vmul.f32 %v428, %v428
  %v778 = vmul.f32 %v562, %v562
  %v779 = vmul.f32 %v430, %v430
  %v780 = vmul.f32 %v564, %v564
  %v781 = vmul.f32 %v433, %v433
  %v782 = vmul.f32 %v567, %v567
  %v783 = vmul.f32 %v435, %v435
  %v784 = vmul.f32 %v569, %v569
  %v785 = vmul.f32 %v438, %v438
  %v786 = vmul.f32 %v572, %v572
  %v787 = vmul.f32 %v440, %v440
  %v788 = vmul.f32 %v574, %v574
  %v789 = vmul.f32 %v443, %v443
  %v790 = vmul.f32 %v577, %v577
  %v791 = vmul.f32 %v445, %v445
  %v792 = vmul.f32 %v579, %v579
  %v793 = vadd.f32 %v693, %v695
  %v794 = vadd.f32 %v793, %v697
  %v795 = vadd.f32 %v794, %v699
  %v796 = vadd.f32 %v795, %v701
  %v797 = vadd.f32 %v796, %v703
  %v798 = vadd.f32 %v797, %v705
  %v799 = vadd.f32 %v798, %v707
  %v800 = vadd.f32 %v799, %v709
  %v801 = vadd.f32 %v800, %v711
  %v802 = vadd.f32 %v801, %v713
  %v803 = vadd.f32 %v802, %v715
  %v804 = vadd.f32 %v803, %v717
  %v805 = vadd.f32 %v804, %v719
  %v806 = vadd.f32 %v805, %v721
  %v807 = vadd.f32 %v806, %v723
  %v808 = vadd.f32 %v807, %v725
  %v809 = vadd.f32 %v808, %v727
  %v810 = vadd.f32 %v809, %v729
  %v811 = vadd.f32 %v810, %v731
  %v812 = vadd.f32 %v811, %v733
  %v813 = vadd.f32 %v812, %v735
  %v814 = vadd.f32 %v813, %v737
  %v815 = vadd.f32 %v814, %v739
  %v816 = vadd.f32 %v815, %v741
  %v817 = vadd.f32 %v816, %v743
  %v818 = vadd.f32 %v817, %v745
  %v819 = vadd.f32 %v818, %v747
  %v820 = vadd.f32 %v819, %v749
  %v821 = vadd.f32 %v820, %v751
  %v822 = vadd.f32 %v821, %v753
  %v823 = vadd.f32 %v822, %v755
  %v824 = vadd.f32 %v823, %v757
  %v825 = vadd.f32 %v824, %v759
  %v826 = vadd.f32 %v825, %v761
  %v827 = vadd.f32 %v826, %v763
  %v828 = vadd.f32 %v827, %v765
  %v829 = vadd.f32 %v828, %v767
  %v830 = vadd.f32 %v829, %v769
  %v831 = vadd.f32 %v830, %v771
  %v832 = vadd.f32 %v831, %v773
  %v833 = vadd.f32 %v832, %v775
  %v834 = vadd.f32 %v833, %v777
  %v835 = vadd.f32 %v834, %v779
  %v836 = vadd.f32 %v835, %v781
  %v837 = vadd.f32 %v836, %v783
  %v838 = vadd.f32 %v837, %v785
  %v839 = vadd.f32 %v838, %v787
  %v840 = vadd.f32 %v839, %v789
  %v841 = vadd.f32 %v840, %v791
  %v842 = vrot.slane %v841, 4
  %v843 = vadd.f32 %v841, %v842
  %v844 = vrot.slane %v843, 2
  %v845 = vadd.f32 %v843, %v844
  %v846 = vrot.slane %v845, 1
  %v847 = vadd.f32 %v845, %v846
  %v848 = vadd.f32 %v694, %v696
  %v849 = vadd.f32 %v848, %v698
  %v850 = vadd.f32 %v849, %v700
  %v851 = vadd.f32 %v850, %v702
  %v852 = vadd.f32 %v851, %v704
  %v853 = vadd.f32 %v852, %v706
  %v854 = vadd.f32 %v853, %v708
  %v855 = vadd.f32 %v854, %v710
  %v856 = vadd.f32 %v855, %v712
  %v857 = vadd.f32 %v856, %v714
  %v858 = vadd.f32 %v857, %v716
  %v859 = vadd.f32 %v858, %v718
  %v860 = vadd.f32 %v859, %v720
  %v861 = vadd.f32 %v860, %v722
  %v862 = vadd.f32 %v861, %v724
  %v863 = vadd.f32 %v862, %v726
  %v864 = vadd.f32 %v863, %v728
  %v865 = vadd.f32 %v864, %v730
  %v866 = vadd.f32 %v865, %v732
  %v867 = vadd.f32 %v866, %v734
  %v868 = vadd.f32 %v867, %v736
  %v869 = vadd.f32 %v868, %v738
  %v870 = vadd.f32 %v869, %v740
  %v871 = vadd.f32 %v870, %v742
  %v872 = vadd.f32 %v871, %v744
  %v873 = vadd.f32 %v872, %v746
  %v874 = vadd.f32 %v873, %v748
  %v875 = vadd.f32 %v874, %v750
  %v876 = vadd.f32 %v875, %v752
  %v877 = vadd.f32 %v876, %v754
  %v878 = vadd.f32 %v877, %v756
  %v879 = vadd.f32 %v878, %v758
  %v880 = vadd.f32 %v879, %v760
  %v881 = vadd.f32 %v880, %v762
  %v882 = vadd.f32 %v881, %v764
  %v883 = vadd.f32 %v882, %v766
  %v884 = vadd.f32 %v883, %v768
  %v885 = vadd.f32 %v884, %v770
  %v886 = vadd.f32 %v885, %v772
  %v887 = vadd.f32 %v886, %v774
  %v888 = vadd.f32 %v887, %v776
  %v889 = vadd.f32 %v888, %v778
  %v890 = vadd.f32 %v889, %v780
  %v891 = vadd.f32 %v890, %v782
  %v892 = vadd.f32 %v891, %v784
  %v893 = vadd.f32 %v892, %v786
  %v894 = vadd.f32 %v893, %v788
  %v895 = vadd.f32 %v894, %v790
  %v896 = vadd.f32 %v895, %v792
  %v897 = vrot.slane %v896, 4
  %v898 = vadd.f32 %v896, %v897
  %v899 = vrot.slane %v898, 2
  %v900 = vadd.f32 %v898, %v899
  %v901 = vrot.slane %v900, 1
  %v902 = vadd.f32 %v900, %v901
  %v903 = vmul.f32 %v847, 0.0025
  %v904 = vmul.f32 %v902, 0.0025
  %v905 = vmul.f32 %v691, %v691
  %v906 = vmul.f32 %v692, %v692
  %v907 = vsub.f32 %v903, %v905
  %v908 = vsub.f32 %v904, %v906
  %v909 = vmax.f32 %v907, 0.0
  %v910 = vmax.f32 %v908, 0.0
  %v911 = vld [vmem:[%s2] ss:$2 sm:$0x3]
  %v912 = vadd.f32 %v909, 1e-05
  %v913 = vadd.f32 %v910, 1e-05
  %v914 = vrsqrt.pop %v912
  %v915 = vmul.f32 %v914, %v912
  %v916 = vmul.f32 %v915, %v914
  %v917 = vmul.f32 0.5, %v916
  %v918 = vsub.f32 1.5, %v917
  %v919 = vmul.f32 %v914, %v918
  %vm920 = vweird.f32 %v912
  %vm921 = vweird.f32 %v914
  %vm922 = vmor %vm920, %vm921
  %v923 = vsel %vm922, %v914, %v919
  %v924 = vrsqrt.pop %v913
  %v925 = vmul.f32 %v924, %v913
  %v926 = vmul.f32 %v925, %v924
  %v927 = vmul.f32 0.5, %v926
  %v928 = vsub.f32 1.5, %v927
  %v929 = vmul.f32 %v924, %v928
  %vm930 = vweird.f32 %v913
  %vm931 = vweird.f32 %v924
  %vm932 = vmor %vm930, %vm931
  %v933 = vsel %vm932, %v924, %v929
  %v936 = vrot.slane %v933, 7
  %vm937 = vcmask 1040384
  %v938 = vsel %vm937, %v923, %v936
  %v940 = vmul.f32 %v911, %v938
  %s941 = scalar_lea.vmem %s2, 1
  %v942 = vld [vmem:[%s941] ss:$2 sm:$0x3]
  %v944 = vperm.slane %v940, 0
  %v945 = vperm.slane %v940, 1
  %v948 = vmul.f32 %v691, %v944
  %v949 = vmul.f32 %v692, %v945
  %v952 = vrot.slane %v949, 7
  %v953 = vsel %vm937, %v948, %v952
  %v955 = vsub.f32 %v942, %v953
  %v956 = vmul.f32 %v323, %v944
  %v957 = vmul.f32 %v457, %v945
  %v958 = vmul.f32 %v325, %v944
  %v959 = vmul.f32 %v459, %v945
  %v960 = vmul.f32 %v328, %v944
  %v961 = vmul.f32 %v462, %v945
  %v962 = vmul.f32 %v330, %v944
  %v963 = vmul.f32 %v464, %v945
  %v964 = vmul.f32 %v333, %v944
  %v965 = vmul.f32 %v467, %v945
  %v966 = vmul.f32 %v335, %v944
  %v967 = vmul.f32 %v469, %v945
  %v968 = vmul.f32 %v338, %v944
  %v969 = vmul.f32 %v472, %v945
  %v970 = vmul.f32 %v340, %v944
  %v971 = vmul.f32 %v474, %v945
  %v972 = vmul.f32 %v343, %v944
  %v973 = vmul.f32 %v477, %v945
  %v974 = vmul.f32 %v345, %v944
  %v975 = vmul.f32 %v479, %v945
  %v976 = vmul.f32 %v348, %v944
  %v977 = vmul.f32 %v482, %v945
  %v978 = vmul.f32 %v350, %v944
  %v979 = vmul.f32 %v484, %v945
  %v980 = vmul.f32 %v353, %v944
  %v981 = vmul.f32 %v487, %v945
  %v982 = vmul.f32 %v355, %v944
  %v983 = vmul.f32 %v489, %v945
  %v984 = vmul.f32 %v358, %v944
  %v985 = vmul.f32 %v492, %v945
  %v986 = vmul.f32 %v360, %v944
  %v987 = vmul.f32 %v494, %v945
  %v988 = vmul.f32 %v363, %v944
  %v989 = vmul.f32 %v497, %v945
  %v990 = vmul.f32 %v365, %v944
  %v991 = vmul.f32 %v499, %v945
  %v992 = vmul.f32 %v368, %v944
  %v993 = vmul.f32 %v502, %v945
  %v994 = vmul.f32 %v370, %v944
  %v995 = vmul.f32 %v504, %v945
  %v996 = vmul.f32 %v373, %v944
  %v997 = vmul.f32 %v507, %v945
  %v998 = vmul.f32 %v375, %v944
  %v999 = vmul.f32 %v509, %v945
  %v1000 = vmul.f32 %v378, %v944
  %v1001 = vmul.f32 %v512, %v945
  %v1002 = vmul.f32 %v380, %v944
  %v1003 = vmul.f32 %v514, %v945
  %v1004 = vmul.f32 %v383, %v944
  %v1005 = vmul.f32 %v517, %v945
  %v1006 = vmul.f32 %v385, %v944
  %v1007 = vmul.f32 %v519, %v945
  %v1008 = vmul.f32 %v388, %v944
  %v1009 = vmul.f32 %v522, %v945
  %v1010 = vmul.f32 %v390, %v944
  %v1011 = vmul.f32 %v524, %v945
  %v1012 = vmul.f32 %v393, %v944
  %v1013 = vmul.f32 %v527, %v945
  %v1014 = vmul.f32 %v395, %v944
  %v1015 = vmul.f32 %v529, %v945
  %v1016 = vmul.f32 %v398, %v944
  %v1017 = vmul.f32 %v532, %v945
  %v1018 = vmul.f32 %v400, %v944
  %v1019 = vmul.f32 %v534, %v945
  %v1020 = vmul.f32 %v403, %v944
  %v1021 = vmul.f32 %v537, %v945
  %v1022 = vmul.f32 %v405, %v944
  %v1023 = vmul.f32 %v539, %v945
  %v1024 = vmul.f32 %v408, %v944
  %v1025 = vmul.f32 %v542, %v945
  %v1026 = vmul.f32 %v410, %v944
  %v1027 = vmul.f32 %v544, %v945
  %v1028 = vmul.f32 %v413, %v944
  %v1029 = vmul.f32 %v547, %v945
  %v1030 = vmul.f32 %v415, %v944
  %v1031 = vmul.f32 %v549, %v945
  %v1032 = vmul.f32 %v418, %v944
  %v1033 = vmul.f32 %v552, %v945
  %v1034 = vmul.f32 %v420, %v944
  %v1035 = vmul.f32 %v554, %v945
  %v1036 = vmul.f32 %v423, %v944
  %v1037 = vmul.f32 %v557, %v945
  %v1038 = vmul.f32 %v425, %v944
  %v1039 = vmul.f32 %v559, %v945
  %v1040 = vmul.f32 %v428, %v944
  %v1041 = vmul.f32 %v562, %v945
  %v1042 = vmul.f32 %v430, %v944
  %v1043 = vmul.f32 %v564, %v945
  %v1044 = vmul.f32 %v433, %v944
  %v1045 = vmul.f32 %v567, %v945
  %v1046 = vmul.f32 %v435, %v944
  %v1047 = vmul.f32 %v569, %v945
  %v1048 = vmul.f32 %v438, %v944
  %v1049 = vmul.f32 %v572, %v945
  %v1050 = vmul.f32 %v440, %v944
  %v1051 = vmul.f32 %v574, %v945
  %v1052 = vmul.f32 %v443, %v944
  %v1053 = vmul.f32 %v577, %v945
  %v1054 = vmul.f32 %v445, %v944
  %v1055 = vmul.f32 %v579, %v945
  %v1057 = vperm.slane %v955, 0
  %v1058 = vperm.slane %v955, 1
  %v1061 = vadd.f32 %v956, %v1057
  %v1062 = vadd.f32 %v957, %v1058
  %v1063 = vadd.f32 %v958, %v1057
  %v1064 = vadd.f32 %v959, %v1058
  %v1065 = vadd.f32 %v960, %v1057
  %v1066 = vadd.f32 %v961, %v1058
  %v1067 = vadd.f32 %v962, %v1057
  %v1068 = vadd.f32 %v963, %v1058
  %v1069 = vadd.f32 %v964, %v1057
  %v1070 = vadd.f32 %v965, %v1058
  %v1071 = vadd.f32 %v966, %v1057
  %v1072 = vadd.f32 %v967, %v1058
  %v1073 = vadd.f32 %v968, %v1057
  %v1074 = vadd.f32 %v969, %v1058
  %v1075 = vadd.f32 %v970, %v1057
  %v1076 = vadd.f32 %v971, %v1058
  %v1077 = vadd.f32 %v972, %v1057
  %v1078 = vadd.f32 %v973, %v1058
  %v1079 = vadd.f32 %v974, %v1057
  %v1080 = vadd.f32 %v975, %v1058
  %v1081 = vadd.f32 %v976, %v1057
  %v1082 = vadd.f32 %v977, %v1058
  %v1083 = vadd.f32 %v978, %v1057
  %v1084 = vadd.f32 %v979, %v1058
  %v1085 = vadd.f32 %v980, %v1057
  %v1086 = vadd.f32 %v981, %v1058
  %v1087 = vadd.f32 %v982, %v1057
  %v1088 = vadd.f32 %v983, %v1058
  %v1089 = vadd.f32 %v984, %v1057
  %v1090 = vadd.f32 %v985, %v1058
  %v1091 = vadd.f32 %v986, %v1057
  %v1092 = vadd.f32 %v987, %v1058
  %v1093 = vadd.f32 %v988, %v1057
  %v1094 = vadd.f32 %v989, %v1058
  %v1095 = vadd.f32 %v990, %v1057
  %v1096 = vadd.f32 %v991, %v1058
  %v1097 = vadd.f32 %v992, %v1057
  %v1098 = vadd.f32 %v993, %v1058
  %v1099 = vadd.f32 %v994, %v1057
  %v1100 = vadd.f32 %v995, %v1058
  %v1101 = vadd.f32 %v996, %v1057
  %v1102 = vadd.f32 %v997, %v1058
  %v1103 = vadd.f32 %v998, %v1057
  %v1104 = vadd.f32 %v999, %v1058
  %v1105 = vadd.f32 %v1000, %v1057
  %v1106 = vadd.f32 %v1001, %v1058
  %v1107 = vadd.f32 %v1002, %v1057
  %v1108 = vadd.f32 %v1003, %v1058
  %v1109 = vadd.f32 %v1004, %v1057
  %v1110 = vadd.f32 %v1005, %v1058
  %v1111 = vadd.f32 %v1006, %v1057
  %v1112 = vadd.f32 %v1007, %v1058
  %v1113 = vadd.f32 %v1008, %v1057
  %v1114 = vadd.f32 %v1009, %v1058
  %v1115 = vadd.f32 %v1010, %v1057
  %v1116 = vadd.f32 %v1011, %v1058
  %v1117 = vadd.f32 %v1012, %v1057
  %v1118 = vadd.f32 %v1013, %v1058
  %v1119 = vadd.f32 %v1014, %v1057
  %v1120 = vadd.f32 %v1015, %v1058
  %v1121 = vadd.f32 %v1016, %v1057
  %v1122 = vadd.f32 %v1017, %v1058
  %v1123 = vadd.f32 %v1018, %v1057
  %v1124 = vadd.f32 %v1019, %v1058
  %v1125 = vadd.f32 %v1020, %v1057
  %v1126 = vadd.f32 %v1021, %v1058
  %v1127 = vadd.f32 %v1022, %v1057
  %v1128 = vadd.f32 %v1023, %v1058
  %v1129 = vadd.f32 %v1024, %v1057
  %v1130 = vadd.f32 %v1025, %v1058
  %v1131 = vadd.f32 %v1026, %v1057
  %v1132 = vadd.f32 %v1027, %v1058
  %v1133 = vadd.f32 %v1028, %v1057
  %v1134 = vadd.f32 %v1029, %v1058
  %v1135 = vadd.f32 %v1030, %v1057
  %v1136 = vadd.f32 %v1031, %v1058
  %v1137 = vadd.f32 %v1032, %v1057
  %v1138 = vadd.f32 %v1033, %v1058
  %v1139 = vadd.f32 %v1034, %v1057
  %v1140 = vadd.f32 %v1035, %v1058
  %v1141 = vadd.f32 %v1036, %v1057
  %v1142 = vadd.f32 %v1037, %v1058
  %v1143 = vadd.f32 %v1038, %v1057
  %v1144 = vadd.f32 %v1039, %v1058
  %v1145 = vadd.f32 %v1040, %v1057
  %v1146 = vadd.f32 %v1041, %v1058
  %v1147 = vadd.f32 %v1042, %v1057
  %v1148 = vadd.f32 %v1043, %v1058
  %v1149 = vadd.f32 %v1044, %v1057
  %v1150 = vadd.f32 %v1045, %v1058
  %v1151 = vadd.f32 %v1046, %v1057
  %v1152 = vadd.f32 %v1047, %v1058
  %v1153 = vadd.f32 %v1048, %v1057
  %v1154 = vadd.f32 %v1049, %v1058
  %v1155 = vadd.f32 %v1050, %v1057
  %v1156 = vadd.f32 %v1051, %v1058
  %v1157 = vadd.f32 %v1052, %v1057
  %v1158 = vadd.f32 %v1053, %v1058
  %v1159 = vadd.f32 %v1054, %v1057
  %v1160 = vadd.f32 %v1055, %v1058
  %v1161 = vmax.f32 %v1061, 0.0
  %v1162 = vmax.f32 %v1062, 0.0
  %v1163 = vmax.f32 %v1063, 0.0
  %v1164 = vmax.f32 %v1064, 0.0
  %v1165 = vmax.f32 %v1065, 0.0
  %v1166 = vmax.f32 %v1066, 0.0
  %v1167 = vmax.f32 %v1067, 0.0
  %v1168 = vmax.f32 %v1068, 0.0
  %v1169 = vmax.f32 %v1069, 0.0
  %v1170 = vmax.f32 %v1070, 0.0
  %v1171 = vmax.f32 %v1071, 0.0
  %v1172 = vmax.f32 %v1072, 0.0
  %v1173 = vmax.f32 %v1073, 0.0
  %v1174 = vmax.f32 %v1074, 0.0
  %v1175 = vmax.f32 %v1075, 0.0
  %v1176 = vmax.f32 %v1076, 0.0
  %v1177 = vmax.f32 %v1077, 0.0
  %v1178 = vmax.f32 %v1078, 0.0
  %v1179 = vmax.f32 %v1079, 0.0
  %v1180 = vmax.f32 %v1080, 0.0
  %v1181 = vmax.f32 %v1081, 0.0
  %v1182 = vmax.f32 %v1082, 0.0
  %v1183 = vmax.f32 %v1083, 0.0
  %v1184 = vmax.f32 %v1084, 0.0
  %v1185 = vmax.f32 %v1085, 0.0
  %v1186 = vmax.f32 %v1086, 0.0
  %v1187 = vmax.f32 %v1087, 0.0
  %v1188 = vmax.f32 %v1088, 0.0
  %v1189 = vmax.f32 %v1089, 0.0
  %v1190 = vmax.f32 %v1090, 0.0
  %v1191 = vmax.f32 %v1091, 0.0
  %v1192 = vmax.f32 %v1092, 0.0
  %v1193 = vmax.f32 %v1093, 0.0
  %v1194 = vmax.f32 %v1094, 0.0
  %v1195 = vmax.f32 %v1095, 0.0
  %v1196 = vmax.f32 %v1096, 0.0
  %v1197 = vmax.f32 %v1097, 0.0
  %v1198 = vmax.f32 %v1098, 0.0
  %v1199 = vmax.f32 %v1099, 0.0
  %v1200 = vmax.f32 %v1100, 0.0
  %v1201 = vmax.f32 %v1101, 0.0
  %v1202 = vmax.f32 %v1102, 0.0
  %v1203 = vmax.f32 %v1103, 0.0
  %v1204 = vmax.f32 %v1104, 0.0
  %v1205 = vmax.f32 %v1105, 0.0
  %v1206 = vmax.f32 %v1106, 0.0
  %v1207 = vmax.f32 %v1107, 0.0
  %v1208 = vmax.f32 %v1108, 0.0
  %v1209 = vmax.f32 %v1109, 0.0
  %v1210 = vmax.f32 %v1110, 0.0
  %v1211 = vmax.f32 %v1111, 0.0
  %v1212 = vmax.f32 %v1112, 0.0
  %v1213 = vmax.f32 %v1113, 0.0
  %v1214 = vmax.f32 %v1114, 0.0
  %v1215 = vmax.f32 %v1115, 0.0
  %v1216 = vmax.f32 %v1116, 0.0
  %v1217 = vmax.f32 %v1117, 0.0
  %v1218 = vmax.f32 %v1118, 0.0
  %v1219 = vmax.f32 %v1119, 0.0
  %v1220 = vmax.f32 %v1120, 0.0
  %v1221 = vmax.f32 %v1121, 0.0
  %v1222 = vmax.f32 %v1122, 0.0
  %v1223 = vmax.f32 %v1123, 0.0
  %v1224 = vmax.f32 %v1124, 0.0
  %v1225 = vmax.f32 %v1125, 0.0
  %v1226 = vmax.f32 %v1126, 0.0
  %v1227 = vmax.f32 %v1127, 0.0
  %v1228 = vmax.f32 %v1128, 0.0
  %v1229 = vmax.f32 %v1129, 0.0
  %v1230 = vmax.f32 %v1130, 0.0
  %v1231 = vmax.f32 %v1131, 0.0
  %v1232 = vmax.f32 %v1132, 0.0
  %v1233 = vmax.f32 %v1133, 0.0
  %v1234 = vmax.f32 %v1134, 0.0
  %v1235 = vmax.f32 %v1135, 0.0
  %v1236 = vmax.f32 %v1136, 0.0
  %v1237 = vmax.f32 %v1137, 0.0
  %v1238 = vmax.f32 %v1138, 0.0
  %v1239 = vmax.f32 %v1139, 0.0
  %v1240 = vmax.f32 %v1140, 0.0
  %v1241 = vmax.f32 %v1141, 0.0
  %v1242 = vmax.f32 %v1142, 0.0
  %v1243 = vmax.f32 %v1143, 0.0
  %v1244 = vmax.f32 %v1144, 0.0
  %v1245 = vmax.f32 %v1145, 0.0
  %v1246 = vmax.f32 %v1146, 0.0
  %v1247 = vmax.f32 %v1147, 0.0
  %v1248 = vmax.f32 %v1148, 0.0
  %v1249 = vmax.f32 %v1149, 0.0
  %v1250 = vmax.f32 %v1150, 0.0
  %v1251 = vmax.f32 %v1151, 0.0
  %v1252 = vmax.f32 %v1152, 0.0
  %v1253 = vmax.f32 %v1153, 0.0
  %v1254 = vmax.f32 %v1154, 0.0
  %v1255 = vmax.f32 %v1155, 0.0
  %v1256 = vmax.f32 %v1156, 0.0
  %v1257 = vmax.f32 %v1157, 0.0
  %v1258 = vmax.f32 %v1158, 0.0
  %v1259 = vmax.f32 %v1159, 0.0
  %v1260 = vmax.f32 %v1160, 0.0
  %v1261 = vpack.c.bf16 %v1163, %v1161
  %v1262 = vpack.c.bf16 %v1164, %v1162
  %v1263 = vpack.c.bf16 %v1167, %v1165
  %v1264 = vpack.c.bf16 %v1168, %v1166
  %v1265 = vpack.c.bf16 %v1171, %v1169
  %v1266 = vpack.c.bf16 %v1172, %v1170
  %v1267 = vpack.c.bf16 %v1175, %v1173
  %v1268 = vpack.c.bf16 %v1176, %v1174
  %v1269 = vpack.c.bf16 %v1179, %v1177
  %v1270 = vpack.c.bf16 %v1180, %v1178
  %v1271 = vpack.c.bf16 %v1183, %v1181
  %v1272 = vpack.c.bf16 %v1184, %v1182
  %v1273 = vpack.c.bf16 %v1187, %v1185
  %v1274 = vpack.c.bf16 %v1188, %v1186
  %v1275 = vpack.c.bf16 %v1191, %v1189
  %v1276 = vpack.c.bf16 %v1192, %v1190
  %v1277 = vpack.c.bf16 %v1195, %v1193
  %v1278 = vpack.c.bf16 %v1196, %v1194
  %v1279 = vpack.c.bf16 %v1199, %v1197
  %v1280 = vpack.c.bf16 %v1200, %v1198
  %v1281 = vpack.c.bf16 %v1203, %v1201
  %v1282 = vpack.c.bf16 %v1204, %v1202
  %v1283 = vpack.c.bf16 %v1207, %v1205
  %v1284 = vpack.c.bf16 %v1208, %v1206
  %v1285 = vpack.c.bf16 %v1211, %v1209
  %v1286 = vpack.c.bf16 %v1212, %v1210
  %v1287 = vpack.c.bf16 %v1215, %v1213
  %v1288 = vpack.c.bf16 %v1216, %v1214
  %v1289 = vpack.c.bf16 %v1219, %v1217
  %v1290 = vpack.c.bf16 %v1220, %v1218
  %v1291 = vpack.c.bf16 %v1223, %v1221
  %v1292 = vpack.c.bf16 %v1224, %v1222
  %v1293 = vpack.c.bf16 %v1227, %v1225
  %v1294 = vpack.c.bf16 %v1228, %v1226
  %v1295 = vpack.c.bf16 %v1231, %v1229
  %v1296 = vpack.c.bf16 %v1232, %v1230
  %v1297 = vpack.c.bf16 %v1235, %v1233
  %v1298 = vpack.c.bf16 %v1236, %v1234
  %v1299 = vpack.c.bf16 %v1239, %v1237
  %v1300 = vpack.c.bf16 %v1240, %v1238
  %v1301 = vpack.c.bf16 %v1243, %v1241
  %v1302 = vpack.c.bf16 %v1244, %v1242
  %v1303 = vpack.c.bf16 %v1247, %v1245
  %v1304 = vpack.c.bf16 %v1248, %v1246
  %v1305 = vpack.c.bf16 %v1251, %v1249
  %v1306 = vpack.c.bf16 %v1252, %v1250
  %v1307 = vpack.c.bf16 %v1255, %v1253
  %v1308 = vpack.c.bf16 %v1256, %v1254
  %v1309 = vpack.c.bf16 %v1259, %v1257
  %v1310 = vpack.c.bf16 %v1260, %v1258
  %v1311 = vld [vmem:[%s3] sm:$0xf]
  %v1312 = vld [vmem:[%s3 + $0x4] sm:$0xf]
  %v1313 = vld [vmem:[%s3 + $0x8] sm:$0xf]
  %v1314 = vld [vmem:[%s3 + $0xc] sm:$0xf]
  %v1315 = vld [vmem:[%s3 + $0x10] sm:$0xf]
  %v1316 = vld [vmem:[%s3 + $0x14] sm:$0xf]
  %v1317 = vld [vmem:[%s3 + $0x18] sm:$0xf]
  %v1318 = vld [vmem:[%s3 + $0x1c] sm:$0xf]
  %v1319 = vld [vmem:[%s3 + $0x20] sm:$0xf]
  %v1320 = vld [vmem:[%s3 + $0x24] sm:$0xf]
  %v1321 = vld [vmem:[%s3 + $0x28] sm:$0xf]
  %v1322 = vld [vmem:[%s3 + $0x2c] sm:$0xf]
  %v1323 = vld [vmem:[%s3 + $0x30] sm:$0xf]
  %v1324 = vld [vmem:[%s3 + $0x34] sm:$0xf]
  %v1325 = vld [vmem:[%s3 + $0x38] sm:$0xf]
  %v1326 = vld [vmem:[%s3 + $0x3c] sm:$0xf]
  %v1327 = vld [vmem:[%s3 + $0x40] sm:$0xf]
  %v1328 = vld [vmem:[%s3 + $0x44] sm:$0xf]
  %v1329 = vld [vmem:[%s3 + $0x48] sm:$0xf]
  %v1330 = vld [vmem:[%s3 + $0x4c] sm:$0xf]
  %v1331 = vld [vmem:[%s3 + $0x50] sm:$0xf]
  %v1332 = vld [vmem:[%s3 + $0x54] sm:$0xf]
  %v1333 = vld [vmem:[%s3 + $0x58] sm:$0xf]
  %v1334 = vld [vmem:[%s3 + $0x5c] sm:$0xf]
  %v1335 = vld [vmem:[%s3 + $0x60] sm:$0xf]
  %v1336 = vld [vmem:[%s3 + $0x64] sm:$0xf]
  %v1337 = vld [vmem:[%s3 + $0x68] sm:$0xf]
  %v1338 = vld [vmem:[%s3 + $0x6c] sm:$0xf]
  %v1339 = vld [vmem:[%s3 + $0x70] sm:$0xf]
  %v1340 = vld [vmem:[%s3 + $0x74] sm:$0xf]
  %v1341 = vld [vmem:[%s3 + $0x78] sm:$0xf]
  %v1342 = vld [vmem:[%s3 + $0x7c] sm:$0xf]
  %v1375 = vunpack.c.l.b16 %v1311
  %v1376 = vunpack.c.l.b16 %v1312
  %v1377 = vunpack.c.l.b16 %v1313
  %v1378 = vunpack.c.l.b16 %v1314
  %v1379 = vunpack.c.l.b16 %v1315
  %v1380 = vunpack.c.l.b16 %v1316
  %v1381 = vunpack.c.l.b16 %v1317
  %v1382 = vunpack.c.l.b16 %v1318
  %v1383 = vunpack.c.l.b16 %v1319
  %v1384 = vunpack.c.l.b16 %v1320
  %v1385 = vunpack.c.l.b16 %v1321
  %v1386 = vunpack.c.l.b16 %v1322
  %v1387 = vunpack.c.l.b16 %v1323
  %v1388 = vunpack.c.l.b16 %v1324
  %v1389 = vunpack.c.l.b16 %v1325
  %v1390 = vunpack.c.l.b16 %v1326
  %v1391 = vunpack.c.l.b16 %v1327
  %v1392 = vunpack.c.l.b16 %v1328
  %v1393 = vunpack.c.l.b16 %v1329
  %v1394 = vunpack.c.l.b16 %v1330
  %v1395 = vunpack.c.l.b16 %v1331
  %v1396 = vunpack.c.l.b16 %v1332
  %v1397 = vunpack.c.l.b16 %v1333
  %v1398 = vunpack.c.l.b16 %v1334
  %v1399 = vunpack.c.l.b16 %v1335
  %v1400 = vunpack.c.l.b16 %v1336
  %v1401 = vunpack.c.l.b16 %v1337
  %v1402 = vunpack.c.l.b16 %v1338
  %v1403 = vunpack.c.l.b16 %v1339
  %v1404 = vunpack.c.l.b16 %v1340
  %v1405 = vunpack.c.l.b16 %v1341
  %v1406 = vunpack.c.l.b16 %v1342
  %v1407 = vpack.c.b16 %v1376, %v1375
  %v1408 = vpack.c.b16 %v1378, %v1377
  %v1409 = vpack.c.b16 %v1380, %v1379
  %v1410 = vpack.c.b16 %v1382, %v1381
  %v1411 = vpack.c.b16 %v1384, %v1383
  %v1412 = vpack.c.b16 %v1386, %v1385
  %v1413 = vpack.c.b16 %v1388, %v1387
  %v1414 = vpack.c.b16 %v1390, %v1389
  %v1415 = vpack.c.b16 %v1392, %v1391
  %v1416 = vpack.c.b16 %v1394, %v1393
  %v1417 = vpack.c.b16 %v1396, %v1395
  %v1418 = vpack.c.b16 %v1398, %v1397
  %v1419 = vpack.c.b16 %v1400, %v1399
  %v1420 = vpack.c.b16 %v1402, %v1401
  %v1421 = vpack.c.b16 %v1404, %v1403
  %v1422 = vpack.c.b16 %v1406, %v1405
  %1439 = vmatpush.bf16.msra.mxu0 %v1414
  %1440 = vmatpush.bf16.msra.mxu0 %v1413
  %1441 = vmatpush.bf16.msra.mxu0 %v1412
  %1442 = vmatpush.bf16.msra.mxu0 %v1411
  %1443 = vmatpush.bf16.msra.mxu0 %v1410
  %1444 = vmatpush.bf16.msra.mxu0 %v1409
  %1445 = vmatpush.bf16.msra.mxu0 %v1408
  %1446 = vmatpush.bf16.msra.mxu0 %v1407
  %1447 = vmatmul.bf16.gmra.mxu0 %v1261
  %v1448 = vpop.f32.mrf.mxu0
  %v1449 = vadd.f32 0.0, %v1448
  %v1450 = vpop.f32.mrf.mxu0
  %v1451 = vadd.f32 0.0, %v1450
  %1452 = vmatmul.bf16.gmra.mxu0 %v1263
  %v1453 = vpop.f32.mrf.mxu0
  %v1454 = vadd.f32 0.0, %v1453
  %v1455 = vpop.f32.mrf.mxu0
  %v1456 = vadd.f32 0.0, %v1455
  %1457 = vmatmul.bf16.gmra.mxu0 %v1265
  %v1458 = vpop.f32.mrf.mxu0
  %v1459 = vadd.f32 0.0, %v1458
  %v1460 = vpop.f32.mrf.mxu0
  %v1461 = vadd.f32 0.0, %v1460
  %1462 = vmatmul.bf16.gmra.mxu0 %v1267
  %v1463 = vpop.f32.mrf.mxu0
  %v1464 = vadd.f32 0.0, %v1463
  %v1465 = vpop.f32.mrf.mxu0
  %v1466 = vadd.f32 0.0, %v1465
  %1467 = vmatmul.bf16.gmra.mxu0 %v1269
  %v1468 = vpop.f32.mrf.mxu0
  %v1469 = vadd.f32 0.0, %v1468
  %v1470 = vpop.f32.mrf.mxu0
  %v1471 = vadd.f32 0.0, %v1470
  %1472 = vmatmul.bf16.gmra.mxu0 %v1271
  %v1473 = vpop.f32.mrf.mxu0
  %v1474 = vadd.f32 0.0, %v1473
  %v1475 = vpop.f32.mrf.mxu0
  %v1476 = vadd.f32 0.0, %v1475
  %1477 = vmatmul.bf16.gmra.mxu0 %v1273
  %v1478 = vpop.f32.mrf.mxu0
  %v1479 = vadd.f32 0.0, %v1478
  %v1480 = vpop.f32.mrf.mxu0
  %v1481 = vadd.f32 0.0, %v1480
  %1482 = vmatmul.bf16.gmra.mxu0 %v1275
  %v1483 = vpop.f32.mrf.mxu0
  %v1484 = vadd.f32 0.0, %v1483
  %v1485 = vpop.f32.mrf.mxu0
  %v1486 = vadd.f32 0.0, %v1485
  %1487 = vmatmul.bf16.gmra.mxu0 %v1277
  %v1488 = vpop.f32.mrf.mxu0
  %v1489 = vadd.f32 0.0, %v1488
  %v1490 = vpop.f32.mrf.mxu0
  %v1491 = vadd.f32 0.0, %v1490
  %1492 = vmatmul.bf16.gmra.mxu0 %v1279
  %v1493 = vpop.f32.mrf.mxu0
  %v1494 = vadd.f32 0.0, %v1493
  %v1495 = vpop.f32.mrf.mxu0
  %v1496 = vadd.f32 0.0, %v1495
  %1497 = vmatmul.bf16.gmra.mxu0 %v1281
  %v1498 = vpop.f32.mrf.mxu0
  %v1499 = vadd.f32 0.0, %v1498
  %v1500 = vpop.f32.mrf.mxu0
  %v1501 = vadd.f32 0.0, %v1500
  %1502 = vmatmul.bf16.gmra.mxu0 %v1283
  %v1503 = vpop.f32.mrf.mxu0
  %v1504 = vadd.f32 0.0, %v1503
  %v1505 = vpop.f32.mrf.mxu0
  %v1506 = vadd.f32 0.0, %v1505
  %1507 = vmatmul.bf16.gmra.mxu0 %v1285
  %v1508 = vpop.f32.mrf.mxu0
  %v1509 = vadd.f32 0.0, %v1508
  %v1510 = vpop.f32.mrf.mxu0
  %v1511 = vadd.f32 0.0, %v1510
  %1512 = vmatmul.bf16.gmra.mxu0 %v1287
  %v1513 = vpop.f32.mrf.mxu0
  %v1514 = vadd.f32 0.0, %v1513
  %v1515 = vpop.f32.mrf.mxu0
  %v1516 = vadd.f32 0.0, %v1515
  %1517 = vmatmul.bf16.gmra.mxu0 %v1289
  %v1518 = vpop.f32.mrf.mxu0
  %v1519 = vadd.f32 0.0, %v1518
  %v1520 = vpop.f32.mrf.mxu0
  %v1521 = vadd.f32 0.0, %v1520
  %1522 = vmatmul.bf16.gmra.mxu0 %v1291
  %v1523 = vpop.f32.mrf.mxu0
  %v1524 = vadd.f32 0.0, %v1523
  %v1525 = vpop.f32.mrf.mxu0
  %v1526 = vadd.f32 0.0, %v1525
  %1527 = vmatmul.bf16.gmra.mxu0 %v1293
  %v1528 = vpop.f32.mrf.mxu0
  %v1529 = vadd.f32 0.0, %v1528
  %v1530 = vpop.f32.mrf.mxu0
  %v1531 = vadd.f32 0.0, %v1530
  %1532 = vmatmul.bf16.gmra.mxu0 %v1295
  %v1533 = vpop.f32.mrf.mxu0
  %v1534 = vadd.f32 0.0, %v1533
  %v1535 = vpop.f32.mrf.mxu0
  %v1536 = vadd.f32 0.0, %v1535
  %1537 = vmatmul.bf16.gmra.mxu0 %v1297
  %v1538 = vpop.f32.mrf.mxu0
  %v1539 = vadd.f32 0.0, %v1538
  %v1540 = vpop.f32.mrf.mxu0
  %v1541 = vadd.f32 0.0, %v1540
  %1542 = vmatmul.bf16.gmra.mxu0 %v1299
  %v1543 = vpop.f32.mrf.mxu0
  %v1544 = vadd.f32 0.0, %v1543
  %v1545 = vpop.f32.mrf.mxu0
  %v1546 = vadd.f32 0.0, %v1545
  %1547 = vmatmul.bf16.gmra.mxu0 %v1301
  %v1548 = vpop.f32.mrf.mxu0
  %v1549 = vadd.f32 0.0, %v1548
  %v1550 = vpop.f32.mrf.mxu0
  %v1551 = vadd.f32 0.0, %v1550
  %1552 = vmatmul.bf16.gmra.mxu0 %v1303
  %v1553 = vpop.f32.mrf.mxu0
  %v1554 = vadd.f32 0.0, %v1553
  %v1555 = vpop.f32.mrf.mxu0
  %v1556 = vadd.f32 0.0, %v1555
  %1557 = vmatmul.bf16.gmra.mxu0 %v1305
  %v1558 = vpop.f32.mrf.mxu0
  %v1559 = vadd.f32 0.0, %v1558
  %v1560 = vpop.f32.mrf.mxu0
  %v1561 = vadd.f32 0.0, %v1560
  %1562 = vmatmul.bf16.gmra.mxu0 %v1307
  %v1563 = vpop.f32.mrf.mxu0
  %v1564 = vadd.f32 0.0, %v1563
  %v1565 = vpop.f32.mrf.mxu0
  %v1566 = vadd.f32 0.0, %v1565
  %1567 = vmatmul.bf16.gmra.mxu0 %v1309
  %v1568 = vpop.f32.mrf.mxu0
  %v1569 = vadd.f32 0.0, %v1568
  %v1570 = vpop.f32.mrf.mxu0
  %v1571 = vadd.f32 0.0, %v1570
  %1572 = vdwg.mxu0
  %1573 = vmatpush.bf16.msra.mxu0 %v1422
  %1574 = vmatpush.bf16.msra.mxu0 %v1421
  %1575 = vmatpush.bf16.msra.mxu0 %v1420
  %1576 = vmatpush.bf16.msra.mxu0 %v1419
  %1577 = vmatpush.bf16.msra.mxu0 %v1418
  %1578 = vmatpush.bf16.msra.mxu0 %v1417
  %1579 = vmatpush.bf16.msra.mxu0 %v1416
  %1580 = vmatpush.bf16.msra.mxu0 %v1415
  %1581 = vmatmul.bf16.gmra.mxu0 %v1262
  %v1582 = vpop.f32.mrf.mxu0
  %v1583 = vadd.f32 %v1449, %v1582
  %v1584 = vpop.f32.mrf.mxu0
  %v1585 = vadd.f32 %v1451, %v1584
  %1586 = vmatmul.bf16.gmra.mxu0 %v1264
  %v1587 = vpop.f32.mrf.mxu0
  %v1588 = vadd.f32 %v1454, %v1587
  %v1589 = vpop.f32.mrf.mxu0
  %v1590 = vadd.f32 %v1456, %v1589
  %1591 = vmatmul.bf16.gmra.mxu0 %v1266
  %v1592 = vpop.f32.mrf.mxu0
  %v1593 = vadd.f32 %v1459, %v1592
  %v1594 = vpop.f32.mrf.mxu0
  %v1595 = vadd.f32 %v1461, %v1594
  %1596 = vmatmul.bf16.gmra.mxu0 %v1268
  %v1597 = vpop.f32.mrf.mxu0
  %v1598 = vadd.f32 %v1464, %v1597
  %v1599 = vpop.f32.mrf.mxu0
  %v1600 = vadd.f32 %v1466, %v1599
  %1601 = vmatmul.bf16.gmra.mxu0 %v1270
  %v1602 = vpop.f32.mrf.mxu0
  %v1603 = vadd.f32 %v1469, %v1602
  %v1604 = vpop.f32.mrf.mxu0
  %v1605 = vadd.f32 %v1471, %v1604
  %1606 = vmatmul.bf16.gmra.mxu0 %v1272
  %v1607 = vpop.f32.mrf.mxu0
  %v1608 = vadd.f32 %v1474, %v1607
  %v1609 = vpop.f32.mrf.mxu0
  %v1610 = vadd.f32 %v1476, %v1609
  %1611 = vmatmul.bf16.gmra.mxu0 %v1274
  %v1612 = vpop.f32.mrf.mxu0
  %v1613 = vadd.f32 %v1479, %v1612
  %v1614 = vpop.f32.mrf.mxu0
  %v1615 = vadd.f32 %v1481, %v1614
  %1616 = vmatmul.bf16.gmra.mxu0 %v1276
  %v1617 = vpop.f32.mrf.mxu0
  %v1618 = vadd.f32 %v1484, %v1617
  %v1619 = vpop.f32.mrf.mxu0
  %v1620 = vadd.f32 %v1486, %v1619
  %1621 = vmatmul.bf16.gmra.mxu0 %v1278
  %v1622 = vpop.f32.mrf.mxu0
  %v1623 = vadd.f32 %v1489, %v1622
  %v1624 = vpop.f32.mrf.mxu0
  %v1625 = vadd.f32 %v1491, %v1624
  %1626 = vmatmul.bf16.gmra.mxu0 %v1280
  %v1627 = vpop.f32.mrf.mxu0
  %v1628 = vadd.f32 %v1494, %v1627
  %v1629 = vpop.f32.mrf.mxu0
  %v1630 = vadd.f32 %v1496, %v1629
  %1631 = vmatmul.bf16.gmra.mxu0 %v1282
  %v1632 = vpop.f32.mrf.mxu0
  %v1633 = vadd.f32 %v1499, %v1632
  %v1634 = vpop.f32.mrf.mxu0
  %v1635 = vadd.f32 %v1501, %v1634
  %1636 = vmatmul.bf16.gmra.mxu0 %v1284
  %v1637 = vpop.f32.mrf.mxu0
  %v1638 = vadd.f32 %v1504, %v1637
  %v1639 = vpop.f32.mrf.mxu0
  %v1640 = vadd.f32 %v1506, %v1639
  %1641 = vmatmul.bf16.gmra.mxu0 %v1286
  %v1642 = vpop.f32.mrf.mxu0
  %v1643 = vadd.f32 %v1509, %v1642
  %v1644 = vpop.f32.mrf.mxu0
  %v1645 = vadd.f32 %v1511, %v1644
  %1646 = vmatmul.bf16.gmra.mxu0 %v1288
  %v1647 = vpop.f32.mrf.mxu0
  %v1648 = vadd.f32 %v1514, %v1647
  %v1649 = vpop.f32.mrf.mxu0
  %v1650 = vadd.f32 %v1516, %v1649
  %1651 = vmatmul.bf16.gmra.mxu0 %v1290
  %v1652 = vpop.f32.mrf.mxu0
  %v1653 = vadd.f32 %v1519, %v1652
  %v1654 = vpop.f32.mrf.mxu0
  %v1655 = vadd.f32 %v1521, %v1654
  %1656 = vmatmul.bf16.gmra.mxu0 %v1292
  %v1657 = vpop.f32.mrf.mxu0
  %v1658 = vadd.f32 %v1524, %v1657
  %v1659 = vpop.f32.mrf.mxu0
  %v1660 = vadd.f32 %v1526, %v1659
  %1661 = vmatmul.bf16.gmra.mxu0 %v1294
  %v1662 = vpop.f32.mrf.mxu0
  %v1663 = vadd.f32 %v1529, %v1662
  %v1664 = vpop.f32.mrf.mxu0
  %v1665 = vadd.f32 %v1531, %v1664
  %1666 = vmatmul.bf16.gmra.mxu0 %v1296
  %v1667 = vpop.f32.mrf.mxu0
  %v1668 = vadd.f32 %v1534, %v1667
  %v1669 = vpop.f32.mrf.mxu0
  %v1670 = vadd.f32 %v1536, %v1669
  %1671 = vmatmul.bf16.gmra.mxu0 %v1298
  %v1672 = vpop.f32.mrf.mxu0
  %v1673 = vadd.f32 %v1539, %v1672
  %v1674 = vpop.f32.mrf.mxu0
  %v1675 = vadd.f32 %v1541, %v1674
  %1676 = vmatmul.bf16.gmra.mxu0 %v1300
  %v1677 = vpop.f32.mrf.mxu0
  %v1678 = vadd.f32 %v1544, %v1677
  %v1679 = vpop.f32.mrf.mxu0
  %v1680 = vadd.f32 %v1546, %v1679
  %1681 = vmatmul.bf16.gmra.mxu0 %v1302
  %v1682 = vpop.f32.mrf.mxu0
  %v1683 = vadd.f32 %v1549, %v1682
  %v1684 = vpop.f32.mrf.mxu0
  %v1685 = vadd.f32 %v1551, %v1684
  %1686 = vmatmul.bf16.gmra.mxu0 %v1304
  %v1687 = vpop.f32.mrf.mxu0
  %v1688 = vadd.f32 %v1554, %v1687
  %v1689 = vpop.f32.mrf.mxu0
  %v1690 = vadd.f32 %v1556, %v1689
  %1691 = vmatmul.bf16.gmra.mxu0 %v1306
  %v1692 = vpop.f32.mrf.mxu0
  %v1693 = vadd.f32 %v1559, %v1692
  %v1694 = vpop.f32.mrf.mxu0
  %v1695 = vadd.f32 %v1561, %v1694
  %1696 = vmatmul.bf16.gmra.mxu0 %v1308
  %v1697 = vpop.f32.mrf.mxu0
  %v1698 = vadd.f32 %v1564, %v1697
  %v1699 = vpop.f32.mrf.mxu0
  %v1700 = vadd.f32 %v1566, %v1699
  %1701 = vmatmul.bf16.gmra.mxu0 %v1310
  %v1702 = vpop.f32.mrf.mxu0
  %v1703 = vadd.f32 %v1569, %v1702
  %v1704 = vpop.f32.mrf.mxu0
  %v1705 = vadd.f32 %v1571, %v1704
  %1706 = vdwg.mxu0
  %v1707 = vadd.f32 %v1583, %v1585
  %v1708 = vadd.f32 %v1707, %v1588
  %v1709 = vadd.f32 %v1708, %v1590
  %v1710 = vadd.f32 %v1709, %v1593
  %v1711 = vadd.f32 %v1710, %v1595
  %v1712 = vadd.f32 %v1711, %v1598
  %v1713 = vadd.f32 %v1712, %v1600
  %v1714 = vadd.f32 %v1713, %v1603
  %v1715 = vadd.f32 %v1714, %v1605
  %v1716 = vadd.f32 %v1715, %v1608
  %v1717 = vadd.f32 %v1716, %v1610
  %v1718 = vadd.f32 %v1717, %v1613
  %v1719 = vadd.f32 %v1718, %v1615
  %v1720 = vadd.f32 %v1719, %v1618
  %v1721 = vadd.f32 %v1720, %v1620
  %v1722 = vadd.f32 %v1721, %v1623
  %v1723 = vadd.f32 %v1722, %v1625
  %v1724 = vadd.f32 %v1723, %v1628
  %v1725 = vadd.f32 %v1724, %v1630
  %v1726 = vadd.f32 %v1725, %v1633
  %v1727 = vadd.f32 %v1726, %v1635
  %v1728 = vadd.f32 %v1727, %v1638
  %v1729 = vadd.f32 %v1728, %v1640
  %v1730 = vadd.f32 %v1729, %v1643
  %v1731 = vadd.f32 %v1730, %v1645
  %v1732 = vadd.f32 %v1731, %v1648
  %v1733 = vadd.f32 %v1732, %v1650
  %v1734 = vadd.f32 %v1733, %v1653
  %v1735 = vadd.f32 %v1734, %v1655
  %v1736 = vadd.f32 %v1735, %v1658
  %v1737 = vadd.f32 %v1736, %v1660
  %v1738 = vadd.f32 %v1737, %v1663
  %v1739 = vadd.f32 %v1738, %v1665
  %v1740 = vadd.f32 %v1739, %v1668
  %v1741 = vadd.f32 %v1740, %v1670
  %v1742 = vadd.f32 %v1741, %v1673
  %v1743 = vadd.f32 %v1742, %v1675
  %v1744 = vadd.f32 %v1743, %v1678
  %v1745 = vadd.f32 %v1744, %v1680
  %v1746 = vadd.f32 %v1745, %v1683
  %v1747 = vadd.f32 %v1746, %v1685
  %v1748 = vadd.f32 %v1747, %v1688
  %v1749 = vadd.f32 %v1748, %v1690
  %v1750 = vadd.f32 %v1749, %v1693
  %v1751 = vadd.f32 %v1750, %v1695
  %v1752 = vadd.f32 %v1751, %v1698
  %v1753 = vadd.f32 %v1752, %v1700
  %v1754 = vadd.f32 %v1753, %v1703
  %v1755 = vadd.f32 %v1754, %v1705
  %v1756 = vrot.slane %v1755, 4
  %v1757 = vadd.f32 %v1755, %v1756
  %v1758 = vrot.slane %v1757, 2
  %v1759 = vadd.f32 %v1757, %v1758
  %v1760 = vrot.slane %v1759, 1
  %v1761 = vadd.f32 %v1759, %v1760
  %v1762 = vmul.f32 %v1761, 0.0025
  %v1763 = vmul.f32 %v1583, %v1583
  %v1764 = vmul.f32 %v1585, %v1585
  %v1765 = vmul.f32 %v1588, %v1588
  %v1766 = vmul.f32 %v1590, %v1590
  %v1767 = vmul.f32 %v1593, %v1593
  %v1768 = vmul.f32 %v1595, %v1595
  %v1769 = vmul.f32 %v1598, %v1598
  %v1770 = vmul.f32 %v1600, %v1600
  %v1771 = vmul.f32 %v1603, %v1603
  %v1772 = vmul.f32 %v1605, %v1605
  %v1773 = vmul.f32 %v1608, %v1608
  %v1774 = vmul.f32 %v1610, %v1610
  %v1775 = vmul.f32 %v1613, %v1613
  %v1776 = vmul.f32 %v1615, %v1615
  %v1777 = vmul.f32 %v1618, %v1618
  %v1778 = vmul.f32 %v1620, %v1620
  %v1779 = vmul.f32 %v1623, %v1623
  %v1780 = vmul.f32 %v1625, %v1625
  %v1781 = vmul.f32 %v1628, %v1628
  %v1782 = vmul.f32 %v1630, %v1630
  %v1783 = vmul.f32 %v1633, %v1633
  %v1784 = vmul.f32 %v1635, %v1635
  %v1785 = vmul.f32 %v1638, %v1638
  %v1786 = vmul.f32 %v1640, %v1640
  %v1787 = vmul.f32 %v1643, %v1643
  %v1788 = vmul.f32 %v1645, %v1645
  %v1789 = vmul.f32 %v1648, %v1648
  %v1790 = vmul.f32 %v1650, %v1650
  %v1791 = vmul.f32 %v1653, %v1653
  %v1792 = vmul.f32 %v1655, %v1655
  %v1793 = vmul.f32 %v1658, %v1658
  %v1794 = vmul.f32 %v1660, %v1660
  %v1795 = vmul.f32 %v1663, %v1663
  %v1796 = vmul.f32 %v1665, %v1665
  %v1797 = vmul.f32 %v1668, %v1668
  %v1798 = vmul.f32 %v1670, %v1670
  %v1799 = vmul.f32 %v1673, %v1673
  %v1800 = vmul.f32 %v1675, %v1675
  %v1801 = vmul.f32 %v1678, %v1678
  %v1802 = vmul.f32 %v1680, %v1680
  %v1803 = vmul.f32 %v1683, %v1683
  %v1804 = vmul.f32 %v1685, %v1685
  %v1805 = vmul.f32 %v1688, %v1688
  %v1806 = vmul.f32 %v1690, %v1690
  %v1807 = vmul.f32 %v1693, %v1693
  %v1808 = vmul.f32 %v1695, %v1695
  %v1809 = vmul.f32 %v1698, %v1698
  %v1810 = vmul.f32 %v1700, %v1700
  %v1811 = vmul.f32 %v1703, %v1703
  %v1812 = vmul.f32 %v1705, %v1705
  %v1813 = vadd.f32 %v1763, %v1764
  %v1814 = vadd.f32 %v1813, %v1765
  %v1815 = vadd.f32 %v1814, %v1766
  %v1816 = vadd.f32 %v1815, %v1767
  %v1817 = vadd.f32 %v1816, %v1768
  %v1818 = vadd.f32 %v1817, %v1769
  %v1819 = vadd.f32 %v1818, %v1770
  %v1820 = vadd.f32 %v1819, %v1771
  %v1821 = vadd.f32 %v1820, %v1772
  %v1822 = vadd.f32 %v1821, %v1773
  %v1823 = vadd.f32 %v1822, %v1774
  %v1824 = vadd.f32 %v1823, %v1775
  %v1825 = vadd.f32 %v1824, %v1776
  %v1826 = vadd.f32 %v1825, %v1777
  %v1827 = vadd.f32 %v1826, %v1778
  %v1828 = vadd.f32 %v1827, %v1779
  %v1829 = vadd.f32 %v1828, %v1780
  %v1830 = vadd.f32 %v1829, %v1781
  %v1831 = vadd.f32 %v1830, %v1782
  %v1832 = vadd.f32 %v1831, %v1783
  %v1833 = vadd.f32 %v1832, %v1784
  %v1834 = vadd.f32 %v1833, %v1785
  %v1835 = vadd.f32 %v1834, %v1786
  %v1836 = vadd.f32 %v1835, %v1787
  %v1837 = vadd.f32 %v1836, %v1788
  %v1838 = vadd.f32 %v1837, %v1789
  %v1839 = vadd.f32 %v1838, %v1790
  %v1840 = vadd.f32 %v1839, %v1791
  %v1841 = vadd.f32 %v1840, %v1792
  %v1842 = vadd.f32 %v1841, %v1793
  %v1843 = vadd.f32 %v1842, %v1794
  %v1844 = vadd.f32 %v1843, %v1795
  %v1845 = vadd.f32 %v1844, %v1796
  %v1846 = vadd.f32 %v1845, %v1797
  %v1847 = vadd.f32 %v1846, %v1798
  %v1848 = vadd.f32 %v1847, %v1799
  %v1849 = vadd.f32 %v1848, %v1800
  %v1850 = vadd.f32 %v1849, %v1801
  %v1851 = vadd.f32 %v1850, %v1802
  %v1852 = vadd.f32 %v1851, %v1803
  %v1853 = vadd.f32 %v1852, %v1804
  %v1854 = vadd.f32 %v1853, %v1805
  %v1855 = vadd.f32 %v1854, %v1806
  %v1856 = vadd.f32 %v1855, %v1807
  %v1857 = vadd.f32 %v1856, %v1808
  %v1858 = vadd.f32 %v1857, %v1809
  %v1859 = vadd.f32 %v1858, %v1810
  %v1860 = vadd.f32 %v1859, %v1811
  %v1861 = vadd.f32 %v1860, %v1812
  %v1862 = vrot.slane %v1861, 4
  %v1863 = vadd.f32 %v1861, %v1862
  %v1864 = vrot.slane %v1863, 2
  %v1865 = vadd.f32 %v1863, %v1864
  %v1866 = vrot.slane %v1865, 1
  %v1867 = vadd.f32 %v1865, %v1866
  %v1868 = vmul.f32 %v1867, 0.0025
  %v1869 = vmul.f32 %v1762, %v1762
  %v1870 = vsub.f32 %v1868, %v1869
  %v1871 = vmax.f32 %v1870, 0.0
  %v1872 = vsub.f32 %v1583, %v1762
  %v1873 = vsub.f32 %v1585, %v1762
  %v1874 = vsub.f32 %v1588, %v1762
  %v1875 = vsub.f32 %v1590, %v1762
  %v1876 = vsub.f32 %v1593, %v1762
  %v1877 = vsub.f32 %v1595, %v1762
  %v1878 = vsub.f32 %v1598, %v1762
  %v1879 = vsub.f32 %v1600, %v1762
  %v1880 = vsub.f32 %v1603, %v1762
  %v1881 = vsub.f32 %v1605, %v1762
  %v1882 = vsub.f32 %v1608, %v1762
  %v1883 = vsub.f32 %v1610, %v1762
  %v1884 = vsub.f32 %v1613, %v1762
  %v1885 = vsub.f32 %v1615, %v1762
  %v1886 = vsub.f32 %v1618, %v1762
  %v1887 = vsub.f32 %v1620, %v1762
  %v1888 = vsub.f32 %v1623, %v1762
  %v1889 = vsub.f32 %v1625, %v1762
  %v1890 = vsub.f32 %v1628, %v1762
  %v1891 = vsub.f32 %v1630, %v1762
  %v1892 = vsub.f32 %v1633, %v1762
  %v1893 = vsub.f32 %v1635, %v1762
  %v1894 = vsub.f32 %v1638, %v1762
  %v1895 = vsub.f32 %v1640, %v1762
  %v1896 = vsub.f32 %v1643, %v1762
  %v1897 = vsub.f32 %v1645, %v1762
  %v1898 = vsub.f32 %v1648, %v1762
  %v1899 = vsub.f32 %v1650, %v1762
  %v1900 = vsub.f32 %v1653, %v1762
  %v1901 = vsub.f32 %v1655, %v1762
  %v1902 = vsub.f32 %v1658, %v1762
  %v1903 = vsub.f32 %v1660, %v1762
  %v1904 = vsub.f32 %v1663, %v1762
  %v1905 = vsub.f32 %v1665, %v1762
  %v1906 = vsub.f32 %v1668, %v1762
  %v1907 = vsub.f32 %v1670, %v1762
  %v1908 = vsub.f32 %v1673, %v1762
  %v1909 = vsub.f32 %v1675, %v1762
  %v1910 = vsub.f32 %v1678, %v1762
  %v1911 = vsub.f32 %v1680, %v1762
  %v1912 = vsub.f32 %v1683, %v1762
  %v1913 = vsub.f32 %v1685, %v1762
  %v1914 = vsub.f32 %v1688, %v1762
  %v1915 = vsub.f32 %v1690, %v1762
  %v1916 = vsub.f32 %v1693, %v1762
  %v1917 = vsub.f32 %v1695, %v1762
  %v1918 = vsub.f32 %v1698, %v1762
  %v1919 = vsub.f32 %v1700, %v1762
  %v1920 = vsub.f32 %v1703, %v1762
  %v1921 = vsub.f32 %v1705, %v1762
  %v1922 = vadd.f32 %v1871, 1e-05
  %v1923 = vrsqrt.pop %v1922
  %v1924 = vmul.f32 %v1923, %v1922
  %v1925 = vmul.f32 %v1924, %v1923
  %v1926 = vmul.f32 0.5, %v1925
  %v1927 = vsub.f32 1.5, %v1926
  %v1928 = vmul.f32 %v1923, %v1927
  %vm1929 = vweird.f32 %v1922
  %vm1930 = vweird.f32 %v1923
  %vm1931 = vmor %vm1929, %vm1930
  %v1932 = vsel %vm1931, %v1923, %v1928
  %v1933 = vmul.f32 %v1872, %v1932
  %v1934 = vmul.f32 %v1873, %v1932
  %v1935 = vmul.f32 %v1874, %v1932
  %v1936 = vmul.f32 %v1875, %v1932
  %v1937 = vmul.f32 %v1876, %v1932
  %v1938 = vmul.f32 %v1877, %v1932
  %v1939 = vmul.f32 %v1878, %v1932
  %v1940 = vmul.f32 %v1879, %v1932
  %v1941 = vmul.f32 %v1880, %v1932
  %v1942 = vmul.f32 %v1881, %v1932
  %v1943 = vmul.f32 %v1882, %v1932
  %v1944 = vmul.f32 %v1883, %v1932
  %v1945 = vmul.f32 %v1884, %v1932
  %v1946 = vmul.f32 %v1885, %v1932
  %v1947 = vmul.f32 %v1886, %v1932
  %v1948 = vmul.f32 %v1887, %v1932
  %v1949 = vmul.f32 %v1888, %v1932
  %v1950 = vmul.f32 %v1889, %v1932
  %v1951 = vmul.f32 %v1890, %v1932
  %v1952 = vmul.f32 %v1891, %v1932
  %v1953 = vmul.f32 %v1892, %v1932
  %v1954 = vmul.f32 %v1893, %v1932
  %v1955 = vmul.f32 %v1894, %v1932
  %v1956 = vmul.f32 %v1895, %v1932
  %v1957 = vmul.f32 %v1896, %v1932
  %v1958 = vmul.f32 %v1897, %v1932
  %v1959 = vmul.f32 %v1898, %v1932
  %v1960 = vmul.f32 %v1899, %v1932
  %v1961 = vmul.f32 %v1900, %v1932
  %v1962 = vmul.f32 %v1901, %v1932
  %v1963 = vmul.f32 %v1902, %v1932
  %v1964 = vmul.f32 %v1903, %v1932
  %v1965 = vmul.f32 %v1904, %v1932
  %v1966 = vmul.f32 %v1905, %v1932
  %v1967 = vmul.f32 %v1906, %v1932
  %v1968 = vmul.f32 %v1907, %v1932
  %v1969 = vmul.f32 %v1908, %v1932
  %v1970 = vmul.f32 %v1909, %v1932
  %v1971 = vmul.f32 %v1910, %v1932
  %v1972 = vmul.f32 %v1911, %v1932
  %v1973 = vmul.f32 %v1912, %v1932
  %v1974 = vmul.f32 %v1913, %v1932
  %v1975 = vmul.f32 %v1914, %v1932
  %v1976 = vmul.f32 %v1915, %v1932
  %v1977 = vmul.f32 %v1916, %v1932
  %v1978 = vmul.f32 %v1917, %v1932
  %v1979 = vmul.f32 %v1918, %v1932
  %v1980 = vmul.f32 %v1919, %v1932
  %v1981 = vmul.f32 %v1920, %v1932
  %v1982 = vmul.f32 %v1921, %v1932
  %v1983 = vpack.c.bf16 %v1933, %v1933
  %v1984 = vpack.c.bf16 %v1934, %v1934
  %v1985 = vpack.c.bf16 %v1935, %v1935
  %v1986 = vpack.c.bf16 %v1936, %v1936
  %v1987 = vpack.c.bf16 %v1937, %v1937
  %v1988 = vpack.c.bf16 %v1938, %v1938
  %v1989 = vpack.c.bf16 %v1939, %v1939
  %v1990 = vpack.c.bf16 %v1940, %v1940
  %v1991 = vpack.c.bf16 %v1941, %v1941
  %v1992 = vpack.c.bf16 %v1942, %v1942
  %v1993 = vpack.c.bf16 %v1943, %v1943
  %v1994 = vpack.c.bf16 %v1944, %v1944
  %v1995 = vpack.c.bf16 %v1945, %v1945
  %v1996 = vpack.c.bf16 %v1946, %v1946
  %v1997 = vpack.c.bf16 %v1947, %v1947
  %v1998 = vpack.c.bf16 %v1948, %v1948
  %v1999 = vpack.c.bf16 %v1949, %v1949
  %v2000 = vpack.c.bf16 %v1950, %v1950
  %v2001 = vpack.c.bf16 %v1951, %v1951
  %v2002 = vpack.c.bf16 %v1952, %v1952
  %v2003 = vpack.c.bf16 %v1953, %v1953
  %v2004 = vpack.c.bf16 %v1954, %v1954
  %v2005 = vpack.c.bf16 %v1955, %v1955
  %v2006 = vpack.c.bf16 %v1956, %v1956
  %v2007 = vpack.c.bf16 %v1957, %v1957
  %v2008 = vpack.c.bf16 %v1958, %v1958
  %v2009 = vpack.c.bf16 %v1959, %v1959
  %v2010 = vpack.c.bf16 %v1960, %v1960
  %v2011 = vpack.c.bf16 %v1961, %v1961
  %v2012 = vpack.c.bf16 %v1962, %v1962
  %v2013 = vpack.c.bf16 %v1963, %v1963
  %v2014 = vpack.c.bf16 %v1964, %v1964
  %v2015 = vpack.c.bf16 %v1965, %v1965
  %v2016 = vpack.c.bf16 %v1966, %v1966
  %v2017 = vpack.c.bf16 %v1967, %v1967
  %v2018 = vpack.c.bf16 %v1968, %v1968
  %v2019 = vpack.c.bf16 %v1969, %v1969
  %v2020 = vpack.c.bf16 %v1970, %v1970
  %v2021 = vpack.c.bf16 %v1971, %v1971
  %v2022 = vpack.c.bf16 %v1972, %v1972
  %v2023 = vpack.c.bf16 %v1973, %v1973
  %v2024 = vpack.c.bf16 %v1974, %v1974
  %v2025 = vpack.c.bf16 %v1975, %v1975
  %v2026 = vpack.c.bf16 %v1976, %v1976
  %v2027 = vpack.c.bf16 %v1977, %v1977
  %v2028 = vpack.c.bf16 %v1978, %v1978
  %v2029 = vpack.c.bf16 %v1979, %v1979
  %v2030 = vpack.c.bf16 %v1980, %v1980
  %v2031 = vpack.c.bf16 %v1981, %v1981
  %v2032 = vpack.c.bf16 %v1982, %v1982
  %2033 = vst [vmem:[%s4] sm:$0xf] %v1983
  %2034 = vst [vmem:[%s4 + $0x4] sm:$0xf] %v1984
  %2035 = vst [vmem:[%s4 + $0x8] sm:$0xf] %v1985
  %2036 = vst [vmem:[%s4 + $0xc] sm:$0xf] %v1986
  %2037 = vst [vmem:[%s4 + $0x10] sm:$0xf] %v1987
  %2038 = vst [vmem:[%s4 + $0x14] sm:$0xf] %v1988
  %2039 = vst [vmem:[%s4 + $0x18] sm:$0xf] %v1989
  %2040 = vst [vmem:[%s4 + $0x1c] sm:$0xf] %v1990
  %2041 = vst [vmem:[%s4 + $0x20] sm:$0xf] %v1991
  %2042 = vst [vmem:[%s4 + $0x24] sm:$0xf] %v1992
  %2043 = vst [vmem:[%s4 + $0x28] sm:$0xf] %v1993
  %2044 = vst [vmem:[%s4 + $0x2c] sm:$0xf] %v1994
  %2045 = vst [vmem:[%s4 + $0x30] sm:$0xf] %v1995
  %2046 = vst [vmem:[%s4 + $0x34] sm:$0xf] %v1996
  %2047 = vst [vmem:[%s4 + $0x38] sm:$0xf] %v1997
  %2048 = vst [vmem:[%s4 + $0x3c] sm:$0xf] %v1998
  %2049 = vst [vmem:[%s4 + $0x40] sm:$0xf] %v1999
  %2050 = vst [vmem:[%s4 + $0x44] sm:$0xf] %v2000
  %2051 = vst [vmem:[%s4 + $0x48] sm:$0xf] %v2001
  %2052 = vst [vmem:[%s4 + $0x4c] sm:$0xf] %v2002
  %2053 = vst [vmem:[%s4 + $0x50] sm:$0xf] %v2003
  %2054 = vst [vmem:[%s4 + $0x54] sm:$0xf] %v2004
  %2055 = vst [vmem:[%s4 + $0x58] sm:$0xf] %v2005
  %2056 = vst [vmem:[%s4 + $0x5c] sm:$0xf] %v2006
  %2057 = vst [vmem:[%s4 + $0x60] sm:$0xf] %v2007
  %2058 = vst [vmem:[%s4 + $0x64] sm:$0xf] %v2008
  %2059 = vst [vmem:[%s4 + $0x68] sm:$0xf] %v2009
  %2060 = vst [vmem:[%s4 + $0x6c] sm:$0xf] %v2010
  %2061 = vst [vmem:[%s4 + $0x70] sm:$0xf] %v2011
  %2062 = vst [vmem:[%s4 + $0x74] sm:$0xf] %v2012
  %2063 = vst [vmem:[%s4 + $0x78] sm:$0xf] %v2013
  %2064 = vst [vmem:[%s4 + $0x7c] sm:$0xf] %v2014
  %2065 = vst [vmem:[%s4 + $0x80] sm:$0xf] %v2015
  %2066 = vst [vmem:[%s4 + $0x84] sm:$0xf] %v2016
  %2067 = vst [vmem:[%s4 + $0x88] sm:$0xf] %v2017
  %2068 = vst [vmem:[%s4 + $0x8c] sm:$0xf] %v2018
  %2069 = vst [vmem:[%s4 + $0x90] sm:$0xf] %v2019
  %2070 = vst [vmem:[%s4 + $0x94] sm:$0xf] %v2020
  %2071 = vst [vmem:[%s4 + $0x98] sm:$0xf] %v2021
  %2072 = vst [vmem:[%s4 + $0x9c] sm:$0xf] %v2022
  %2073 = vst [vmem:[%s4 + $0xa0] sm:$0xf] %v2023
  %2074 = vst [vmem:[%s4 + $0xa4] sm:$0xf] %v2024
  %2075 = vst [vmem:[%s4 + $0xa8] sm:$0xf] %v2025
  %2076 = vst [vmem:[%s4 + $0xac] sm:$0xf] %v2026
  %2077 = vst [vmem:[%s4 + $0xb0] sm:$0xf] %v2027
  %2078 = vst [vmem:[%s4 + $0xb4] sm:$0xf] %v2028
  %2079 = vst [vmem:[%s4 + $0xb8] sm:$0xf] %v2029
  %2080 = vst [vmem:[%s4 + $0xbc] sm:$0xf] %v2030
  %2081 = vst [vmem:[%s4 + $0xc0] sm:$0xf] %v2031
  %2082 = vst [vmem:[%s4 + $0xc4] sm:$0xf] %v2032
  // Predicated region
  $region18: #{projection_mlp.1} parent=0 // pred_check
    _
  $region19: #{projection_mlp.1} parent=0 // pred_check_branch
    %2084 = sbr.rel (0) target = $region21
  $region20: #{projection_mlp.1} parent=0 // pred_region
    _
  $region21: #{projection_mlp.1} parent=0 // pred_fallthru
    _
  // Predicated region
  $region22: #{projection_mlp.1} parent=0 // pred_check
    _
  $region23: #{projection_mlp.1} parent=0 // pred_check_branch
    %2086 = sbr.rel (0) target = $region25
  $region24: #{projection_mlp.1} parent=0 // pred_region
    _
  $region25: #{projection_mlp.1} parent=0 // pred_fallthru
    _

</llo_original>
